<compile_context>
chip_gen: v5e
topology: v5e:2x2
jax: 0.10.0
libtpu: 0.0.40
codegen_flags: <defaults>
</compile_context>

<pallas_src>
import jax
import jax.numpy as jnp
from jax.experimental import pallas as pl
from jax.experimental.pallas import tpu as pltpu

BN_EPS = 1e-5


# --------------------------------------------------------------------------
# hardware-aware budgets
# --------------------------------------------------------------------------
def _tpu_vmem_bytes(default=64 << 20):
    """Physical VMEM capacity; conservative v7x default (64 MiB) on failure."""
    try:
        return int(pltpu.get_tpu_info().vmem_capacity_bytes)
    except Exception:
        return default


def _vmem_limit(est_bytes, cap):
    return int(min(max(2 * est_bytes, 8 << 20), cap))


# --------------------------------------------------------------------------
# kernel 1: streaming global-avg-pool -> 1x1 conv -> BN (training stats)
# --------------------------------------------------------------------------
def _make_pool_bn_kernel(inv_hw):
    def kernel(x0_ref, x1_ref,
               wconv0_ref, wconv1_ref,
               g0_ref, b0_ref, g1_ref, b1_ref,
               bn0_ref, bn1_ref, p0_ref, p1_ref,
               acc0_ref, acc1_ref):
        k = pl.program_id(0)

        @pl.when(k == 0)
        def _init():
            acc0_ref[...] = jnp.zeros_like(acc0_ref)
            acc1_ref[...] = jnp.zeros_like(acc1_ref)

        # streaming pooled-sum accumulation: sublane reduction over the HW
        # chunk, f32 accumulation regardless of the input dtype (bf16 ok).
        acc0_ref[...] += jnp.sum(x0_ref[...].astype(jnp.float32), axis=1)
        acc1_ref[...] += jnp.sum(x1_ref[...].astype(jnp.float32), axis=1)

        @pl.when(k == pl.num_programs(0) - 1)
        def _finalize():
            pooled0 = acc0_ref[...] * inv_hw          # [N, C] global avg pool
            pooled1 = acc1_ref[...] * inv_hw

            def bottleneck(pooled, wconv_ref, g_ref, b_ref):
                # 1x1 conv (bias=False) on a 1x1 spatial map == matmul.
                # Weights are stored bf16 (HBM/VMEM savings); cast in-vreg.
                emb = jnp.dot(pooled, wconv_ref[...].astype(jnp.float32),
                              preferred_element_type=jnp.float32)   # [N, E]
                # BatchNorm, training mode: biased batch statistics (two-pass)
                mu = jnp.mean(emb, axis=0, keepdims=True)
                var = jnp.mean((emb - mu) ** 2, axis=0, keepdims=True)
                return (emb - mu) * jax.lax.rsqrt(var + BN_EPS) * g_ref[...] \
                    + b_ref[...]

            bn0_ref[...] = bottleneck(pooled0, wconv0_ref, g0_ref, b0_ref)
            bn1_ref[...] = bottleneck(pooled1, wconv1_ref, g1_ref, b1_ref)
            # neck_feat == 'before': two lane-dense pooled outputs; the wrapper
            # concatenates (tiny [N, 2C] copy, avoids misaligned masked stores)
            p0_ref[...] = pooled0
            p1_ref[...] = pooled1

    return kernel


# --------------------------------------------------------------------------
# kernel 2: class-tiled linear classifiers (bias=False) + summed logits
# --------------------------------------------------------------------------
def _classifier_kernel(bn0_ref, bn1_ref, wcls0_ref, wcls1_ref,
                       cls0_ref, cls1_ref, logits_ref):
    # bf16 x bf16 -> f32 (MXU native); wcls tiles streamed from HBM as bf16.
    b0 = bn0_ref[...].astype(jnp.bfloat16)
    b1 = bn1_ref[...].astype(jnp.bfloat16)
    c0 = jnp.dot(b0, wcls0_ref[...], preferred_element_type=jnp.float32)
    c1 = jnp.dot(b1, wcls1_ref[...], preferred_element_type=jnp.float32)
    # TODO(synk): could emit bf16 outputs if downstream tolerates it.
    cls0_ref[...] = c0
    cls1_ref[...] = c1
    logits_ref[...] = c0 + c1          # pred_class_logits, per class tile


# --------------------------------------------------------------------------
# tiling helpers
# --------------------------------------------------------------------------
def _pick_hw_tile(hw, n, c, itemsize, budget_bytes, min_run_bytes=2048):
    """Largest sublane-pack-aligned divisor of hw whose [N, hw_tile, C] block
    fits the per-block budget, with a contiguity floor on the per-row DMA run
    (hw_tile * C * itemsize)."""
    pack = max(1, 4 // itemsize)         # 1 for f32, 2 for bf16, 4 for int8/fp8
    step = 8 * pack                      # min second-to-last tile dim for dtype
    if hw % step != 0:
        return hw                        # full-extent block is always legal
    max_rows = max(step, budget_bytes // max(1, n * c * itemsize))
    divisors = [t for t in range(step, hw + 1, step) if hw % t == 0]
    in_budget = [t for t in divisors if t <= max_rows]
    best = in_budget[-1] if in_budget else divisors[0]
    if best * c * itemsize < min_run_bytes:
        bigger = [t for t in divisors if t * c * itemsize >= min_run_bytes]
        if bigger:
            best = bigger[0]
    return best


def _pick_cls_tile(nc_pad, e, budget_bytes):
    """Class-tile width: multiple of 128 dividing the padded class count.
    Prefers >= 2 tiles so the 'parallel' class axis can span both TensorCores
    on v7x (per-step overhead is negligible here)."""
    max_t = max(128, ((budget_bytes // (16 * e)) // 128) * 128)
    t = max(128, (min(nc_pad, max_t) // 128) * 128)
    while nc_pad % t != 0:
        t -= 128
    if t == nc_pad and nc_pad > 128:
        half = ((nc_pad // 2) // 128) * 128
        while half >= 128 and nc_pad % half != 0:
            half -= 128
        if half >= 128:
            t = half
    return t


def _full_spec(shape):
    nd = len(shape)
    return pl.BlockSpec(shape, lambda k, _nd=nd: (0,) * _nd)


# --------------------------------------------------------------------------
# one-time weight preparation (do NOT run per forward step)
# --------------------------------------------------------------------------
def prepare_params(params):
    """Transpose / pad / bf16-cast weights once:
       - 1x1 conv weights   [E, C, 1, 1] -> bf16 [C, E]
       - classifier weights [num_classes, E] -> bf16 [E, nc_pad] (zero padded
         to a multiple of 128; padding must stay zero: the partial final class
         tile of kernel 2 reads those columns)
       - BN gamma/beta -> f32 [1, E] rows."""
    wconv = [w.reshape(w.shape[0], w.shape[1]).T.astype(jnp.bfloat16)
             for w in params["wconv"]]
    e = wconv[0].shape[1]
    num_classes = params["wcls"][0].shape[0]
    nc_pad = ((num_classes + 127) // 128) * 128
    wcls = [jnp.pad(w.T, ((0, 0), (0, nc_pad - num_classes))).astype(jnp.bfloat16)
            for w in params["wcls"]]
    return {
        "wconv": wconv,                                  # bf16 [C, E]
        "wcls": wcls,                                    # bf16 [E, nc_pad]
        "gamma": [g.reshape(1, e).astype(jnp.float32) for g in params["gamma"]],
        "beta": [b.reshape(1, e).astype(jnp.float32) for b in params["beta"]],
        "num_classes": num_classes,
    }


# --------------------------------------------------------------------------
# forward wrapper
# --------------------------------------------------------------------------
def multi_head_v2_forward(features, prepared, *, hw_tile=None, cls_tile=None):
    """features: list of 2 NHWC arrays [N, H, W, C] (native dtype, bf16 ok).
    prepared: output of prepare_params().  Returns the PyTorch training-mode
    output dict."""
    x0, x1 = features
    n, h, w, c = x0.shape
    hw = h * w
    e = prepared["wconv"][0].shape[1]
    nc_pad = prepared["wcls"][0].shape[1]
    num_classes = prepared["num_classes"]

    x0f = x0.reshape(n, hw, c)        # free reshape: no transpose / dtype copy
    x1f = x1.reshape(n, hw, c)

    # generation-aware budgets (v5e/v6e: 128 MiB VMEM -> bigger blocks, higher
    # cap; v7x: 64 MiB -> conservative blocks, <=40 MiB scoped limit).
    vmem_cap = _tpu_vmem_bytes()
    big_vmem = vmem_cap >= (100 << 20)
    hw_budget = (12 << 20) if big_vmem else (4 << 20)
    cls_budget = (24 << 20) if big_vmem else (8 << 20)
    limit_cap = (64 << 20) if big_vmem else (40 << 20)

    if hw_tile is None:
        hw_tile = _pick_hw_tile(hw, n, c, x0f.dtype.itemsize, hw_budget)
    assert hw % hw_tile == 0, "hw_tile must divide H*W"
    num_hw = hw // hw_tile
    inv_hw = 1.0 / float(hw)

    # ---- kernel 1: pool + 1x1 conv + BN (streamed over HW chunks) ----
    in_block_bytes = n * hw_tile * c * x0f.dtype.itemsize
    est1 = (2 * 2 * in_block_bytes                        # inputs, double-buffered
            + 2 * 2 * (c * e * 2 + 2 * e * 4)             # bf16 conv + BN params
            + 2 * 2 * (n * e * 4 + n * c * 4)             # bn + pooled outputs
            + 2 * n * c * 4)                              # f32 accumulators

    bn0, bn1, pooled0, pooled1 = pl.pallas_call(
        _make_pool_bn_kernel(inv_hw),
        out_shape=(
            jax.ShapeDtypeStruct((n, e), jnp.float32),
            jax.ShapeDtypeStruct((n, e), jnp.float32),
            jax.ShapeDtypeStruct((n, c), jnp.float32),
            jax.ShapeDtypeStruct((n, c), jnp.float32),
        ),
        grid_spec=pltpu.PrefetchScalarGridSpec(
            num_scalar_prefetch=0,
            grid=(num_hw,),
            in_specs=[
                pl.BlockSpec((n, hw_tile, c), lambda k: (0, k, 0)),
                pl.BlockSpec((n, hw_tile, c), lambda k: (0, k, 0)),
                _full_spec((c, e)), _full_spec((c, e)),
                _full_spec((1, e)), _full_spec((1, e)),
                _full_spec((1, e)), _full_spec((1, e)),
            ],
            out_specs=(_full_spec((n, e)), _full_spec((n, e)),
                       _full_spec((n, c)), _full_spec((n, c))),
            scratch_shapes=[pltpu.VMEM((n, c), jnp.float32),
                            pltpu.VMEM((n, c), jnp.float32)],
        ),
        compiler_params=pltpu.CompilerParams(
            dimension_semantics=("arbitrary",),       # HW is a reduction axis
            vmem_limit_bytes=_vmem_limit(est1, limit_cap)),
    )(x0f, x1f,
      prepared["wconv"][0], prepared["wconv"][1],
      prepared["gamma"][0], prepared["beta"][0],
      prepared["gamma"][1], prepared["beta"][1])

    # ---- kernel 2: class-tiled classifiers + summed logits ----
    if cls_tile is None:
        cls_tile = _pick_cls_tile(nc_pad, e, cls_budget)
    assert nc_pad % cls_tile == 0 and cls_tile % 128 == 0
    num_cls_tiles = nc_pad // cls_tile      # covers all weight columns; the
                                            # final output tile may be partial

    est2 = (2 * 2 * e * cls_tile * 2                      # bf16 weight tiles
            + 2 * 2 * n * e * 4                           # bn inputs
            + 3 * 2 * n * cls_tile * 4)                   # f32 outputs

    cls0, cls1, logits = pl.pallas_call(
        _classifier_kernel,
        out_shape=(
            jax.ShapeDtypeStruct((n, num_classes), jnp.float32),
            jax.ShapeDtypeStruct((n, num_classes), jnp.float32),
            jax.ShapeDtypeStruct((n, num_classes), jnp.float32),
        ),
        grid_spec=pltpu.PrefetchScalarGridSpec(
            num_scalar_prefetch=0,
            grid=(num_cls_tiles,),
            in_specs=[
                pl.BlockSpec((n, e), lambda j: (0, 0)),
                pl.BlockSpec((n, e), lambda j: (0, 0)),
                pl.BlockSpec((e, cls_tile), lambda j: (0, j)),
                pl.BlockSpec((e, cls_tile), lambda j: (0, j)),
            ],
            out_specs=(
                pl.BlockSpec((n, cls_tile), lambda j: (0, j)),
                pl.BlockSpec((n, cls_tile), lambda j: (0, j)),
                pl.BlockSpec((n, cls_tile), lambda j: (0, j)),
            ),
        ),
        compiler_params=pltpu.CompilerParams(
            dimension_semantics=("parallel",),
            vmem_limit_bytes=_vmem_limit(est2, limit_cap)),
    )(bn0, bn1, prepared["wcls"][0], prepared["wcls"][1])

    return {
        "cls_outputs": [cls0, cls1],
        "pred_class_logits": logits,
        # neck_feat == 'before': cat(global_feat, dim=1)[..., 0, 0]
        "features": jnp.concatenate([pooled0, pooled1], axis=1),
    }


# --------------------------------------------------------------------------
# pure-JAX reference (matches the PyTorch training-mode forward, NHWC input,
# full-precision f32 weights)
# --------------------------------------------------------------------------
def reference_forward(features, params):
    cls_outputs, pooled_all = [], []
    for b in range(2):
        x = features[b].astype(jnp.float32)
        pooled = jnp.mean(x, axis=(1, 2))                 # AdaptiveAvgPool2d(1)
        e_dim, c_dim = params["wconv"][b].shape[:2]
        wconv = params["wconv"][b].reshape(e_dim, c_dim)
        emb = pooled @ wconv.T                            # 1x1 conv, bias=False
        mu = jnp.mean(emb, axis=0, keepdims=True)
        var = jnp.mean((emb - mu) ** 2, axis=0, keepdims=True)
        bn = (emb - mu) * jax.lax.rsqrt(var + BN_EPS) * params["gamma"][b] \
            + params["beta"][b]
        cls_outputs.append(bn @ params["wcls"][b].T)
        pooled_all.append(pooled)
    return {
        "cls_outputs": cls_outputs,
        "pred_class_logits": cls_outputs[0] + cls_outputs[1],
        "features": jnp.concatenate(pooled_all, axis=1),
    }


if __name__ == "__main__":
    # Small demo shapes: batch=4, feat_dim(C)=32, embedding_dim=32,
    # classes=200 (padded to 256 -> 2 class tiles), spatial 8x8 with hw_tile=32
    # -> 2 grid steps exercising the streaming pooled-sum accumulation.
    N, H, W, C = 4, 8, 8, 32
    E, NUM_CLASSES = 32, 200

    key = jax.random.PRNGKey(0)
    k = jax.random.split(key, 6)

    # NHWC, bf16 in HBM (f32 accumulation happens in-kernel)
    features = [
        jax.random.normal(k[0], (N, H, W, C), jnp.float32).astype(jnp.bfloat16),
        jax.random.normal(k[1], (N, H, W, C), jnp.float32).astype(jnp.bfloat16),
    ]

    conv_std = (2.0 / C) ** 0.5
    params = {
        "wconv": [
            jax.random.normal(k[2], (E, C, 1, 1), jnp.float32) * conv_std,
            jax.random.normal(k[3], (E, C, 1, 1), jnp.float32) * conv_std,
        ],
        "gamma": [jnp.ones((E,), jnp.float32), jnp.ones((E,), jnp.float32)],
        "beta": [jnp.zeros((E,), jnp.float32), jnp.zeros((E,), jnp.float32)],
        "wcls": [
            jax.random.normal(k[4], (NUM_CLASSES, E), jnp.float32) * 0.001,
            jax.random.normal(k[5], (NUM_CLASSES, E), jnp.float32) * 0.001,
        ],
    }

    prepared = prepare_params(params)   # one-time transposes / padding / bf16

    out = multi_head_v2_forward(features, prepared, hw_tile=32)
    jax.block_until_ready(out)

    ref = reference_forward(features, params)

    def check(a, b, rtol, atol):
        assert a.shape == b.shape, (a.shape, b.shape)
        assert jnp.allclose(a, b, rtol=rtol, atol=atol), (
            float(jnp.max(jnp.abs(a - b))))

    # pooled features are exact f32 math in both paths
    check(out["features"], ref["features"], rtol=1e-5, atol=1e-5)
    # classifier outputs: kernel stores weights in bf16 (deliberate perf
    # change), so compare against the f32 reference with bf16-level tolerance
    check(out["cls_outputs"][0], ref["cls_outputs"][0], rtol=2e-2, atol=3e-4)
    check(out["cls_outputs"][1], ref["cls_outputs"][1], rtol=2e-2, atol=3e-4)
    check(out["pred_class_logits"], ref["pred_class_logits"], rtol=2e-2, atol=5e-4)

    print("KERNEL_OK")
</pallas_src>

<mosaic_0001>
module attributes {stable_mosaic.version = 11 : i64} {
  func.func @kernel(%arg0: i32, %arg1: memref<4x32x32xbf16, #tpu.memory_space<vmem>>, %arg2: memref<4x32x32xbf16, #tpu.memory_space<vmem>>, %arg3: memref<32x32xbf16, #tpu.memory_space<vmem>>, %arg4: memref<32x32xbf16, #tpu.memory_space<vmem>>, %arg5: memref<1x32xf32, #tpu.memory_space<vmem>>, %arg6: memref<1x32xf32, #tpu.memory_space<vmem>>, %arg7: memref<1x32xf32, #tpu.memory_space<vmem>>, %arg8: memref<1x32xf32, #tpu.memory_space<vmem>>, %arg9: memref<4x32xf32, #tpu.memory_space<vmem>>, %arg10: memref<4x32xf32, #tpu.memory_space<vmem>>, %arg11: memref<4x32xf32, #tpu.memory_space<vmem>>, %arg12: memref<4x32xf32, #tpu.memory_space<vmem>>, %arg13: memref<4x32xf32, #tpu.memory_space<vmem>>, %arg14: memref<4x32xf32, #tpu.memory_space<vmem>>) attributes {dimension_semantics = [#tpu.dimension_semantics<arbitrary>], iteration_bounds = array<i64: 2>, scalar_prefetch = 0 : i64, scratch_operands = 2 : i64, tpu.core_type = #tpu.core_type<tc>, window_params = [{transform_indices = @transform_0, window_bounds = array<i64: 4, 32, 32>}, {transform_indices = @transform_1, window_bounds = array<i64: 4, 32, 32>}, {pipeline_mode = #tpu.pipeline_mode<synchronous>, transform_indices = @transform_2, window_bounds = array<i64: 32, 32>}, {pipeline_mode = #tpu.pipeline_mode<synchronous>, transform_indices = @transform_3, window_bounds = array<i64: 32, 32>}, {pipeline_mode = #tpu.pipeline_mode<synchronous>, transform_indices = @transform_4, window_bounds = array<i64: 1, 32>}, {pipeline_mode = #tpu.pipeline_mode<synchronous>, transform_indices = @transform_5, window_bounds = array<i64: 1, 32>}, {pipeline_mode = #tpu.pipeline_mode<synchronous>, transform_indices = @transform_6, window_bounds = array<i64: 1, 32>}, {pipeline_mode = #tpu.pipeline_mode<synchronous>, transform_indices = @transform_7, window_bounds = array<i64: 1, 32>}, {pipeline_mode = #tpu.pipeline_mode<synchronous>, transform_indices = @transform_8, window_bounds = array<i64: 4, 32>}, {pipeline_mode = #tpu.pipeline_mode<synchronous>, transform_indices = @transform_9, window_bounds = array<i64: 4, 32>}, {pipeline_mode = #tpu.pipeline_mode<synchronous>, transform_indices = @transform_10, window_bounds = array<i64: 4, 32>}, {pipeline_mode = #tpu.pipeline_mode<synchronous>, transform_indices = @transform_11, window_bounds = array<i64: 4, 32>}]} {
    %c0_i32 = arith.constant 0 : i32
    %0 = arith.cmpi eq, %arg0, %c0_i32 : i32
    %1 = arith.extui %0 : i1 to i32
    %c0_i32_0 = arith.constant 0 : i32
    %2 = arith.cmpi ne, %1, %c0_i32_0 : i32
    scf.if %2 {
      %cst_16 = arith.constant 0.000000e+00 : f32
      %18 = vector.broadcast %cst_16 : f32 to vector<4x32xf32>
      %c0_17 = arith.constant 0 : index
      %c0_18 = arith.constant 0 : index
      %19 = vector.load %arg13[%c0_17, %c0_18] : memref<4x32xf32, #tpu.memory_space<vmem>>, vector<4x32xf32>
      tpu.vector_store %arg13[%c0_17, %c0_18], %18 {strides = array<i32>} : memref<4x32xf32, #tpu.memory_space<vmem>>, vector<4x32xf32>,
      %cst_19 = arith.constant 0.000000e+00 : f32
      %20 = vector.broadcast %cst_19 : f32 to vector<4x32xf32>
      %c0_20 = arith.constant 0 : index
      %c0_21 = arith.constant 0 : index
      %21 = vector.load %arg14[%c0_20, %c0_21] : memref<4x32xf32, #tpu.memory_space<vmem>>, vector<4x32xf32>
      tpu.vector_store %arg14[%c0_20, %c0_21], %20 {strides = array<i32>} : memref<4x32xf32, #tpu.memory_space<vmem>>, vector<4x32xf32>,
    } else {
    }
    %c0 = arith.constant 0 : index
    %c0_1 = arith.constant 0 : index
    %3 = vector.load %arg13[%c0, %c0_1] : memref<4x32xf32, #tpu.memory_space<vmem>>, vector<4x32xf32>
    %c0_2 = arith.constant 0 : index
    %c0_3 = arith.constant 0 : index
    %c0_4 = arith.constant 0 : index
    %4 = vector.load %arg1[%c0_2, %c0_3, %c0_4] : memref<4x32x32xbf16, #tpu.memory_space<vmem>>, vector<4x32x32xbf16>
    %5 = arith.extf %4 : vector<4x32x32xbf16> to vector<4x32x32xf32>
    %cst = arith.constant dense<0.000000e+00> : vector<4x32xf32>
    %6 = vector.multi_reduction <add>, %5, %cst [1] : vector<4x32x32xf32> to vector<4x32xf32>
    %7 = arith.addf %3, %6 : vector<4x32xf32>
    %c0_5 = arith.constant 0 : index
    %c0_6 = arith.constant 0 : index
    %8 = vector.load %arg13[%c0_5, %c0_6] : memref<4x32xf32, #tpu.memory_space<vmem>>, vector<4x32xf32>
    tpu.vector_store %arg13[%c0_5, %c0_6], %7 {strides = array<i32>} : memref<4x32xf32, #tpu.memory_space<vmem>>, vector<4x32xf32>,
    %c0_7 = arith.constant 0 : index
    %c0_8 = arith.constant 0 : index
    %9 = vector.load %arg14[%c0_7, %c0_8] : memref<4x32xf32, #tpu.memory_space<vmem>>, vector<4x32xf32>
    %c0_9 = arith.constant 0 : index
    %c0_10 = arith.constant 0 : index
    %c0_11 = arith.constant 0 : index
    %10 = vector.load %arg2[%c0_9, %c0_10, %c0_11] : memref<4x32x32xbf16, #tpu.memory_space<vmem>>, vector<4x32x32xbf16>
    %11 = arith.extf %10 : vector<4x32x32xbf16> to vector<4x32x32xf32>
    %cst_12 = arith.constant dense<0.000000e+00> : vector<4x32xf32>
    %12 = vector.multi_reduction <add>, %11, %cst_12 [1] : vector<4x32x32xf32> to vector<4x32xf32>
    %13 = arith.addf %9, %12 : vector<4x32xf32>
    %c0_13 = arith.constant 0 : index
    %c0_14 = arith.constant 0 : index
    %14 = vector.load %arg14[%c0_13, %c0_14] : memref<4x32xf32, #tpu.memory_space<vmem>>, vector<4x32xf32>
    tpu.vector_store %arg14[%c0_13, %c0_14], %13 {strides = array<i32>} : memref<4x32xf32, #tpu.memory_space<vmem>>, vector<4x32xf32>,
    %c1_i32 = arith.constant 1 : i32
    %15 = arith.cmpi eq, %arg0, %c1_i32 : i32
    %16 = arith.extui %15 : i1 to i32
    %c0_i32_15 = arith.constant 0 : i32
    %17 = arith.cmpi ne, %16, %c0_i32_15 : i32
    scf.if %17 {
      %c0_16 = arith.constant 0 : index
      %c0_17 = arith.constant 0 : index
      %18 = vector.load %arg13[%c0_16, %c0_17] : memref<4x32xf32, #tpu.memory_space<vmem>>, vector<4x32xf32>
      %cst_18 = arith.constant 1.562500e-02 : f32
      %19 = vector.broadcast %cst_18 : f32 to vector<4x32xf32>
      %20 = arith.mulf %18, %19 : vector<4x32xf32>
      %c0_19 = arith.constant 0 : index
      %c0_20 = arith.constant 0 : index
      %21 = vector.load %arg14[%c0_19, %c0_20] : memref<4x32xf32, #tpu.memory_space<vmem>>, vector<4x32xf32>
      %cst_21 = arith.constant 1.562500e-02 : f32
      %22 = vector.broadcast %cst_21 : f32 to vector<4x32xf32>
      %23 = arith.mulf %21, %22 : vector<4x32xf32>
      %c0_22 = arith.constant 0 : index
      %c0_23 = arith.constant 0 : index
      %24 = vector.load %arg3[%c0_22, %c0_23] : memref<32x32xbf16, #tpu.memory_space<vmem>>, vector<32x32xbf16>
      %25 = arith.extf %24 : vector<32x32xbf16> to vector<32x32xf32>
      %cst_24 = arith.constant dense<0.000000e+00> : vector<4x32xf32>
      %26 = tpu.matmul %20, %25, %cst_24 {dimension_numbers = #tpu.dot_dimension_numbers<[1], [0], [0], [1], [0, 0, 1, 1], [], []>} : vector<4x32xf32>, vector<32x32xf32>, vector<4x32xf32> -> vector<4x32xf32>
      %cst_25 = arith.constant dense<0.000000e+00> : vector<32xf32>
      %27 = vector.multi_reduction <add>, %26, %cst_25 [0] : vector<4x32xf32> to vector<32xf32>
      %28 = vector.shape_cast %27 : vector<32xf32> to vector<1x32xf32>
      %cst_26 = arith.constant 4.000000e+00 : f32
      %29 = vector.broadcast %cst_26 : f32 to vector<1x32xf32>
      %30 = arith.divf %28, %29 : vector<1x32xf32>
      %31 = vector.broadcast %30 : vector<1x32xf32> to vector<4x32xf32>
      %32 = arith.subf %26, %31 : vector<4x32xf32>
      %33 = arith.mulf %32, %32 : vector<4x32xf32>
      %cst_27 = arith.constant dense<0.000000e+00> : vector<32xf32>
      %34 = vector.multi_reduction <add>, %33, %cst_27 [0] : vector<4x32xf32> to vector<32xf32>
      %35 = vector.shape_cast %34 : vector<32xf32> to vector<1x32xf32>
      %cst_28 = arith.constant 4.000000e+00 : f32
      %36 = vector.broadcast %cst_28 : f32 to vector<1x32xf32>
      %37 = arith.divf %35, %36 : vector<1x32xf32>
      %38 = vector.broadcast %30 : vector<1x32xf32> to vector<4x32xf32>
      %39 = arith.subf %26, %38 : vector<4x32xf32>
      %cst_29 = arith.constant 9.99999974E-6 : f32
      %40 = vector.broadcast %cst_29 : f32 to vector<1x32xf32>
      %41 = arith.addf %37, %40 : vector<1x32xf32>
      %42 = math.rsqrt %41 : vector<1x32xf32>
      %43 = vector.broadcast %42 : vector<1x32xf32> to vector<4x32xf32>
      %44 = arith.mulf %39, %43 : vector<4x32xf32>
      %c0_30 = arith.constant 0 : index
      %c0_31 = arith.constant 0 : index
      %45 = vector.load %arg5[%c0_30, %c0_31] : memref<1x32xf32, #tpu.memory_space<vmem>>, vector<1x32xf32>
      %46 = vector.broadcast %45 : vector<1x32xf32> to vector<4x32xf32>
      %47 = arith.mulf %44, %46 : vector<4x32xf32>
      %c0_32 = arith.constant 0 : index
      %c0_33 = arith.constant 0 : index
      %48 = vector.load %arg6[%c0_32, %c0_33] : memref<1x32xf32, #tpu.memory_space<vmem>>, vector<1x32xf32>
      %49 = vector.broadcast %48 : vector<1x32xf32> to vector<4x32xf32>
      %50 = arith.addf %47, %49 : vector<4x32xf32>
      %c0_34 = arith.constant 0 : index
      %c0_35 = arith.constant 0 : index
      %51 = vector.load %arg9[%c0_34, %c0_35] : memref<4x32xf32, #tpu.memory_space<vmem>>, vector<4x32xf32>
      tpu.vector_store %arg9[%c0_34, %c0_35], %50 {strides = array<i32>} : memref<4x32xf32, #tpu.memory_space<vmem>>, vector<4x32xf32>,
      %c0_36 = arith.constant 0 : index
      %c0_37 = arith.constant 0 : index
      %52 = vector.load %arg4[%c0_36, %c0_37] : memref<32x32xbf16, #tpu.memory_space<vmem>>, vector<32x32xbf16>
      %53 = arith.extf %52 : vector<32x32xbf16> to vector<32x32xf32>
      %cst_38 = arith.constant dense<0.000000e+00> : vector<4x32xf32>
      %54 = tpu.matmul %23, %53, %cst_38 {dimension_numbers = #tpu.dot_dimension_numbers<[1], [0], [0], [1], [0, 0, 1, 1], [], []>} : vector<4x32xf32>, vector<32x32xf32>, vector<4x32xf32> -> vector<4x32xf32>
      %cst_39 = arith.constant dense<0.000000e+00> : vector<32xf32>
      %55 = vector.multi_reduction <add>, %54, %cst_39 [0] : vector<4x32xf32> to vector<32xf32>
      %56 = vector.shape_cast %55 : vector<32xf32> to vector<1x32xf32>
      %cst_40 = arith.constant 4.000000e+00 : f32
      %57 = vector.broadcast %cst_40 : f32 to vector<1x32xf32>
      %58 = arith.divf %56, %57 : vector<1x32xf32>
      %59 = vector.broadcast %58 : vector<1x32xf32> to vector<4x32xf32>
      %60 = arith.subf %54, %59 : vector<4x32xf32>
      %61 = arith.mulf %60, %60 : vector<4x32xf32>
      %cst_41 = arith.constant dense<0.000000e+00> : vector<32xf32>
      %62 = vector.multi_reduction <add>, %61, %cst_41 [0] : vector<4x32xf32> to vector<32xf32>
      %63 = vector.shape_cast %62 : vector<32xf32> to vector<1x32xf32>
      %cst_42 = arith.constant 4.000000e+00 : f32
      %64 = vector.broadcast %cst_42 : f32 to vector<1x32xf32>
      %65 = arith.divf %63, %64 : vector<1x32xf32>
      %66 = vector.broadcast %58 : vector<1x32xf32> to vector<4x32xf32>
      %67 = arith.subf %54, %66 : vector<4x32xf32>
      %cst_43 = arith.constant 9.99999974E-6 : f32
      %68 = vector.broadcast %cst_43 : f32 to vector<1x32xf32>
      %69 = arith.addf %65, %68 : vector<1x32xf32>
      %70 = math.rsqrt %69 : vector<1x32xf32>
      %71 = vector.broadcast %70 : vector<1x32xf32> to vector<4x32xf32>
      %72 = arith.mulf %67, %71 : vector<4x32xf32>
      %c0_44 = arith.constant 0 : index
      %c0_45 = arith.constant 0 : index
      %73 = vector.load %arg7[%c0_44, %c0_45] : memref<1x32xf32, #tpu.memory_space<vmem>>, vector<1x32xf32>
      %74 = vector.broadcast %73 : vector<1x32xf32> to vector<4x32xf32>
      %75 = arith.mulf %72, %74 : vector<4x32xf32>
      %c0_46 = arith.constant 0 : index
      %c0_47 = arith.constant 0 : index
      %76 = vector.load %arg8[%c0_46, %c0_47] : memref<1x32xf32, #tpu.memory_space<vmem>>, vector<1x32xf32>
      %77 = vector.broadcast %76 : vector<1x32xf32> to vector<4x32xf32>
      %78 = arith.addf %75, %77 : vector<4x32xf32>
      %c0_48 = arith.constant 0 : index
      %c0_49 = arith.constant 0 : index
      %79 = vector.load %arg10[%c0_48, %c0_49] : memref<4x32xf32, #tpu.memory_space<vmem>>, vector<4x32xf32>
      tpu.vector_store %arg10[%c0_48, %c0_49], %78 {strides = array<i32>} : memref<4x32xf32, #tpu.memory_space<vmem>>, vector<4x32xf32>,
      %c0_50 = arith.constant 0 : index
      %c0_51 = arith.constant 0 : index
      %80 = vector.load %arg11[%c0_50, %c0_51] : memref<4x32xf32, #tpu.memory_space<vmem>>, vector<4x32xf32>
      tpu.vector_store %arg11[%c0_50, %c0_51], %20 {strides = array<i32>} : memref<4x32xf32, #tpu.memory_space<vmem>>, vector<4x32xf32>,
      %c0_52 = arith.constant 0 : index
      %c0_53 = arith.constant 0 : index
      %81 = vector.load %arg12[%c0_52, %c0_53] : memref<4x32xf32, #tpu.memory_space<vmem>>, vector<4x32xf32>
      tpu.vector_store %arg12[%c0_52, %c0_53], %23 {strides = array<i32>} : memref<4x32xf32, #tpu.memory_space<vmem>>, vector<4x32xf32>,
    } else {
    }
    return
  }
  func.func @transform_0(%arg0: i32) -> (i32, i32, i32) {
    %c0_i32 = arith.constant 0 : i32
    %c0_i32_0 = arith.constant 0 : i32
    %c0_i32_1 = arith.constant 0 : i32
    return %c0_i32, %arg0, %c0_i32_0 : i32, i32, i32
  }
  func.func @transform_1(%arg0: i32) -> (i32, i32, i32) {
    %c0_i32 = arith.constant 0 : i32
    %c0_i32_0 = arith.constant 0 : i32
    %c0_i32_1 = arith.constant 0 : i32
    return %c0_i32, %arg0, %c0_i32_0 : i32, i32, i32
  }
  func.func @transform_2(%arg0: i32) -> (i32, i32) {
    %c0_i32 = arith.constant 0 : i32
    %c0_i32_0 = arith.constant 0 : i32
    %c0_i32_1 = arith.constant 0 : i32
    return %c0_i32, %c0_i32_0 : i32, i32
  }
  func.func @transform_3(%arg0: i32) -> (i32, i32) {
    %c0_i32 = arith.constant 0 : i32
    %c0_i32_0 = arith.constant 0 : i32
    %c0_i32_1 = arith.constant 0 : i32
    return %c0_i32, %c0_i32_0 : i32, i32
  }
  func.func @transform_4(%arg0: i32) -> (i32, i32) {
    %c0_i32 = arith.constant 0 : i32
    %c0_i32_0 = arith.constant 0 : i32
    %c0_i32_1 = arith.constant 0 : i32
    return %c0_i32, %c0_i32_0 : i32, i32
  }
  func.func @transform_5(%arg0: i32) -> (i32, i32) {
    %c0_i32 = arith.constant 0 : i32
    %c0_i32_0 = arith.constant 0 : i32
    %c0_i32_1 = arith.constant 0 : i32
    return %c0_i32, %c0_i32_0 : i32, i32
  }
  func.func @transform_6(%arg0: i32) -> (i32, i32) {
    %c0_i32 = arith.constant 0 : i32
    %c0_i32_0 = arith.constant 0 : i32
    %c0_i32_1 = arith.constant 0 : i32
    return %c0_i32, %c0_i32_0 : i32, i32
  }
  func.func @transform_7(%arg0: i32) -> (i32, i32) {
    %c0_i32 = arith.constant 0 : i32
    %c0_i32_0 = arith.constant 0 : i32
    %c0_i32_1 = arith.constant 0 : i32
    return %c0_i32, %c0_i32_0 : i32, i32
  }
  func.func @transform_8(%arg0: i32) -> (i32, i32) {
    %c0_i32 = arith.constant 0 : i32
    %c0_i32_0 = arith.constant 0 : i32
    %c0_i32_1 = arith.constant 0 : i32
    return %c0_i32, %c0_i32_0 : i32, i32
  }
  func.func @transform_9(%arg0: i32) -> (i32, i32) {
    %c0_i32 = arith.constant 0 : i32
    %c0_i32_0 = arith.constant 0 : i32
    %c0_i32_1 = arith.constant 0 : i32
    return %c0_i32, %c0_i32_0 : i32, i32
  }
  func.func @transform_10(%arg0: i32) -> (i32, i32) {
    %c0_i32 = arith.constant 0 : i32
    %c0_i32_0 = arith.constant 0 : i32
    %c0_i32_1 = arith.constant 0 : i32
    return %c0_i32, %c0_i32_0 : i32, i32
  }
  func.func @transform_11(%arg0: i32) -> (i32, i32) {
    %c0_i32 = arith.constant 0 : i32
    %c0_i32_0 = arith.constant 0 : i32
    %c0_i32_1 = arith.constant 0 : i32
    return %c0_i32, %c0_i32_0 : i32, i32
  }
}

</mosaic_0001>

<llo_original>
// kernel: tpu_custom_call.1
$region0: #{tpu_custom_call.1}
  #allocation0 [shape = 'u32[]', space=smem, size = 0x4, offset = 0x4, fixed_abs, tag = 'smem constant byte address 0x4 - core index']
  #allocation1 [shape = 'u32[72,128]{1,0:T(1,128)}', space=vmem, size = 0x9000, scoped, tag = 'internal scratch']
  #allocation2 [shape = 'f32[4,32]{1,0:T(4,128)}', space=vmem, size = 0x800, scoped, tag = 'scratch operand']
  #allocation3 [shape = 'f32[4,32]{1,0:T(4,128)}', space=vmem, size = 0x800, scoped, tag = 'scratch operand']
  %s0 = inlined_call_operand.vmem [shape: bf16[4,64,32], index: 0, kind: input, shape index: {}]
  %s1 = inlined_call_operand.vmem [shape: bf16[4,64,32], index: 1, kind: input, shape index: {}]
  %s2 = inlined_call_operand.vmem [shape: bf16[32,32], index: 2, kind: input, shape index: {}]
  %s3 = inlined_call_operand.vmem [shape: bf16[32,32], index: 3, kind: input, shape index: {}]
  %s4 = inlined_call_operand.vmem [shape: f32[1,32], index: 4, kind: input, shape index: {}]
  %s5 = inlined_call_operand.vmem [shape: f32[1,32], index: 5, kind: input, shape index: {}]
  %s6 = inlined_call_operand.vmem [shape: f32[1,32], index: 6, kind: input, shape index: {}]
  %s7 = inlined_call_operand.vmem [shape: f32[1,32], index: 7, kind: input, shape index: {}]
  %s8 = inlined_call_operand.hbm [shape: f32[4,32], index: 8, kind: output, shape index: {0}]
  %s9 = inlined_call_operand.hbm [shape: f32[4,32], index: 9, kind: output, shape index: {1}]
  %s10 = inlined_call_operand.hbm [shape: f32[4,32], index: 10, kind: output, shape index: {2}]
  %s11 = inlined_call_operand.hbm [shape: f32[4,32], index: 11, kind: output, shape index: {3}]
  %12 = xla_tuple %s8, %s9, %s10, %s11
  %s13 = sld [smem:[#allocation0]]
  $region179: #{tpu_custom_call.1} parent=0
    _
  %s15 = ssub.s32 1, %s13
  %s16 = scalar_select 0, %s15, %s13
  $region1: #{tpu_custom_call.1} parent=0
    #allocation4 [shape = 'u8[65536]{0}', space=vmem, size = 0x10000, scoped, tag = 'input window, operand 0']
    #allocation5 [shape = 'u8[65536]{0}', space=vmem, size = 0x10000, scoped, tag = 'input window, operand 1']
    #allocation6 [shape = 'u8[2048]{0}', space=vmem, size = 0x800, scoped, tag = 'output window, operand 0, single buffered']
    #allocation7 [shape = 's32[2]{0}', space=sflag, size = 0x8, scoped, tag = 'scoped memory for tpu_custom_call.1']
    #allocation8 [shape = 'u8[2048]{0}', space=vmem, size = 0x800, scoped, tag = 'output window, operand 1, single buffered']
    #allocation9 [shape = 's32[1]{0}', space=sflag, size = 0x4, scoped, tag = 'scoped memory for tpu_custom_call.1']
    #allocation10 [shape = 'u8[2048]{0}', space=vmem, size = 0x800, scoped, tag = 'output window, operand 2, single buffered']
    #allocation11 [shape = 'u8[2048]{0}', space=vmem, size = 0x800, scoped, tag = 'output window, operand 3, single buffered']
    #allocation12 [shape = 's32[1]{0}', space=sflag, size = 0x4, scoped, tag = 'scoped memory for tpu_custom_call.1']
    %17 = vsyncpa [#allocation7], 0
    %18 = vsyncpa [#allocation9], 0
    %19 = vsyncpa [#allocation12], 0
    loop: start=0, step=1, limit=4
    $region2: #{tpu_custom_call.1} parent=1 // loop_pre_header
      _
    $region3: #{tpu_custom_call.1} parent=1 // loop_header
      %s21 = sphi 0, %s25
      %p22 = scmp.ge.s32.totalorder %s21, 4
      %s31 = sphi 0, %s33
      %s34 = sphi 0, %s31
      %s35 = sphi 0, %s34
      %s51 = sphi 0, %s35
      %s57 = sphi 0, %s59
      %s60 = sphi 0, %s57
      %s61 = sphi 0, %s60
      %s77 = sphi 0, %s61
      %s81 = sphi 0, %s81
      %s83 = sphi 0, %s81
      %s84 = sphi 0, %s83
      %s98 = sphi 0, %s84
      %s102 = sphi 0, %s102
      %s104 = sphi 0, %s102
      %s105 = sphi 0, %s104
      %s119 = sphi 0, %s105
      %s123 = sphi 0, %s123
      %s125 = sphi 0, %s123
      %s126 = sphi 0, %s125
      %s140 = sphi 0, %s126
      %s144 = sphi 0, %s144
      %s146 = sphi 0, %s144
      %s147 = sphi 0, %s146
      %s161 = sphi 0, %s147
      %s165 = sphi 0, %s165
      %s167 = sphi 0, %s165
      %s168 = sphi 0, %s167
      %s182 = sphi 0, %s168
      %s186 = sphi 0, %s186
      %s188 = sphi 0, %s186
      %s189 = sphi 0, %s188
      %s203 = sphi 0, %s189
      %s207 = sphi 0, %s207
      %s209 = sphi 0, %s207
      %s210 = sphi 0, %s209
      %s224 = sphi 0, %s210
      %s228 = sphi 0, %s228
      %s230 = sphi 0, %s228
      %s231 = sphi 0, %s230
      %s245 = sphi 0, %s231
      %s249 = sphi 0, %s249
      %s251 = sphi 0, %s249
      %s252 = sphi 0, %s251
      %s266 = sphi 0, %s252
      %s270 = sphi 0, %s270
      %s272 = sphi 0, %s270
      %s273 = sphi 0, %s272
      %s287 = sphi 0, %s273
    $region4: #{tpu_custom_call.1} parent=1 // loop_header_branch
      %24 = sbr.rel (%p22) target = $region8
    $region5: #{tpu_custom_call.1} parent=1 // loop_body
      %s26 = ssub.s32 %s21, 1
      %s27 = ssub.s32 %s21, 2
      %s28 = sadd.s32 %s21, 1
      %s29 = ssub.s32 %s21, %s28
      %p30 = scmp.eq.s32.totalorder %s29, 0
      %s32 = sadd.s32 %s31, 1
      %s33 = scalar_select %p30, %s31, %s32
      %p36 = pneg %p30
      %p37 = scmp.eq.s32.totalorder %s21, 1
      %p38 = por %p36, %p37
      %p39 = scmp.ne.s32.totalorder %s31, %s34
      %p40 = scmp.eq.s32.totalorder %s21, 0
      %p41 = por %p39, %p40
      %p42 = scmp.ne.s32.totalorder %s31, %s34
      %p43 = scmp.eq.s32.totalorder %s26, 1
      %p44 = por %p42, %p43
      %p45 = scmp.ne.s32.totalorder %s34, %s35
      %p46 = scmp.eq.s32.totalorder %s26, 0
      %p47 = por %p45, %p46
      %p48 = scmp.ne.s32.totalorder %s34, %s35
      %p49 = scmp.eq.s32.totalorder %s27, 1
      %p50 = por %p48, %p49
      %p52 = scmp.ne.s32.totalorder %s35, %s51
      %p53 = scmp.eq.s32.totalorder %s27, 0
      %p54 = por %p52, %p53
      %s55 = ssub.s32 %s21, %s28
      %p56 = scmp.eq.s32.totalorder %s55, 0
      %s58 = sadd.s32 %s57, 1
      %s59 = scalar_select %p56, %s57, %s58
      %p62 = pneg %p56
      %p63 = scmp.eq.s32.totalorder %s21, 1
      %p64 = por %p62, %p63
      %p65 = scmp.ne.s32.totalorder %s57, %s60
      %p66 = scmp.eq.s32.totalorder %s21, 0
      %p67 = por %p65, %p66
      %p68 = scmp.ne.s32.totalorder %s57, %s60
      %p69 = scmp.eq.s32.totalorder %s26, 1
      %p70 = por %p68, %p69
      %p71 = scmp.ne.s32.totalorder %s60, %s61
      %p72 = scmp.eq.s32.totalorder %s26, 0
      %p73 = por %p71, %p72
      %p74 = scmp.ne.s32.totalorder %s60, %s61
      %p75 = scmp.eq.s32.totalorder %s27, 1
      %p76 = por %p74, %p75
      %p78 = scmp.ne.s32.totalorder %s61, %s77
      %p79 = scmp.eq.s32.totalorder %s27, 0
      %p80 = por %p78, %p79
      %s82 = sadd.s32 %s81, 1
      %p85 = scmp.eq.s32.totalorder %s21, 1
      %p86 = scmp.ne.s32.totalorder %s81, %s83
      %p87 = scmp.eq.s32.totalorder %s21, 0
      %p88 = por %p86, %p87
      %p89 = scmp.ne.s32.totalorder %s81, %s83
      %p90 = scmp.eq.s32.totalorder %s26, 1
      %p91 = por %p89, %p90
      %p92 = scmp.ne.s32.totalorder %s83, %s84
      %p93 = scmp.eq.s32.totalorder %s26, 0
      %p94 = por %p92, %p93
      %p95 = scmp.ne.s32.totalorder %s83, %s84
      %p96 = scmp.eq.s32.totalorder %s27, 1
      %p97 = por %p95, %p96
      %p99 = scmp.ne.s32.totalorder %s84, %s98
      %p100 = scmp.eq.s32.totalorder %s27, 0
      %p101 = por %p99, %p100
      %s103 = sadd.s32 %s102, 1
      %p106 = scmp.eq.s32.totalorder %s21, 1
      %p107 = scmp.ne.s32.totalorder %s102, %s104
      %p108 = scmp.eq.s32.totalorder %s21, 0
      %p109 = por %p107, %p108
      %p110 = scmp.ne.s32.totalorder %s102, %s104
      %p111 = scmp.eq.s32.totalorder %s26, 1
      %p112 = por %p110, %p111
      %p113 = scmp.ne.s32.totalorder %s104, %s105
      %p114 = scmp.eq.s32.totalorder %s26, 0
      %p115 = por %p113, %p114
      %p116 = scmp.ne.s32.totalorder %s104, %s105
      %p117 = scmp.eq.s32.totalorder %s27, 1
      %p118 = por %p116, %p117
      %p120 = scmp.ne.s32.totalorder %s105, %s119
      %p121 = scmp.eq.s32.totalorder %s27, 0
      %p122 = por %p120, %p121
      %s124 = sadd.s32 %s123, 1
      %p127 = scmp.eq.s32.totalorder %s21, 1
      %p128 = scmp.ne.s32.totalorder %s123, %s125
      %p129 = scmp.eq.s32.totalorder %s21, 0
      %p130 = por %p128, %p129
      %p131 = scmp.ne.s32.totalorder %s123, %s125
      %p132 = scmp.eq.s32.totalorder %s26, 1
      %p133 = por %p131, %p132
      %p134 = scmp.ne.s32.totalorder %s125, %s126
      %p135 = scmp.eq.s32.totalorder %s26, 0
      %p136 = por %p134, %p135
      %p137 = scmp.ne.s32.totalorder %s125, %s126
      %p138 = scmp.eq.s32.totalorder %s27, 1
      %p139 = por %p137, %p138
      %p141 = scmp.ne.s32.totalorder %s126, %s140
      %p142 = scmp.eq.s32.totalorder %s27, 0
      %p143 = por %p141, %p142
      %s145 = sadd.s32 %s144, 1
      %p148 = scmp.eq.s32.totalorder %s21, 1
      %p149 = scmp.ne.s32.totalorder %s144, %s146
      %p150 = scmp.eq.s32.totalorder %s21, 0
      %p151 = por %p149, %p150
      %p152 = scmp.ne.s32.totalorder %s144, %s146
      %p153 = scmp.eq.s32.totalorder %s26, 1
      %p154 = por %p152, %p153
      %p155 = scmp.ne.s32.totalorder %s146, %s147
      %p156 = scmp.eq.s32.totalorder %s26, 0
      %p157 = por %p155, %p156
      %p158 = scmp.ne.s32.totalorder %s146, %s147
      %p159 = scmp.eq.s32.totalorder %s27, 1
      %p160 = por %p158, %p159
      %p162 = scmp.ne.s32.totalorder %s147, %s161
      %p163 = scmp.eq.s32.totalorder %s27, 0
      %p164 = por %p162, %p163
      %s166 = sadd.s32 %s165, 1
      %p169 = scmp.eq.s32.totalorder %s21, 1
      %p170 = scmp.ne.s32.totalorder %s165, %s167
      %p171 = scmp.eq.s32.totalorder %s21, 0
      %p172 = por %p170, %p171
      %p173 = scmp.ne.s32.totalorder %s165, %s167
      %p174 = scmp.eq.s32.totalorder %s26, 1
      %p175 = por %p173, %p174
      %p176 = scmp.ne.s32.totalorder %s167, %s168
      %p177 = scmp.eq.s32.totalorder %s26, 0
      %p178 = por %p176, %p177
      %p179 = scmp.ne.s32.totalorder %s167, %s168
      %p180 = scmp.eq.s32.totalorder %s27, 1
      %p181 = por %p179, %p180
      %p183 = scmp.ne.s32.totalorder %s168, %s182
      %p184 = scmp.eq.s32.totalorder %s27, 0
      %p185 = por %p183, %p184
      %s187 = sadd.s32 %s186, 1
      %p190 = scmp.eq.s32.totalorder %s21, 1
      %p191 = scmp.ne.s32.totalorder %s186, %s188
      %p192 = scmp.eq.s32.totalorder %s21, 0
      %p193 = por %p191, %p192
      %p194 = scmp.ne.s32.totalorder %s186, %s188
      %p195 = scmp.eq.s32.totalorder %s26, 1
      %p196 = por %p194, %p195
      %p197 = scmp.ne.s32.totalorder %s188, %s189
      %p198 = scmp.eq.s32.totalorder %s26, 0
      %p199 = por %p197, %p198
      %p200 = scmp.ne.s32.totalorder %s188, %s189
      %p201 = scmp.eq.s32.totalorder %s27, 1
      %p202 = por %p200, %p201
      %p204 = scmp.ne.s32.totalorder %s189, %s203
      %p205 = scmp.eq.s32.totalorder %s27, 0
      %p206 = por %p204, %p205
      %s208 = sadd.s32 %s207, 1
      %p211 = scmp.eq.s32.totalorder %s21, 1
      %p212 = scmp.ne.s32.totalorder %s207, %s209
      %p213 = scmp.eq.s32.totalorder %s21, 0
      %p214 = por %p212, %p213
      %p215 = scmp.ne.s32.totalorder %s207, %s209
      %p216 = scmp.eq.s32.totalorder %s26, 1
      %p217 = por %p215, %p216
      %p218 = scmp.ne.s32.totalorder %s209, %s210
      %p219 = scmp.eq.s32.totalorder %s26, 0
      %p220 = por %p218, %p219
      %p221 = scmp.ne.s32.totalorder %s209, %s210
      %p222 = scmp.eq.s32.totalorder %s27, 1
      %p223 = por %p221, %p222
      %p225 = scmp.ne.s32.totalorder %s210, %s224
      %p226 = scmp.eq.s32.totalorder %s27, 0
      %p227 = por %p225, %p226
      %s229 = sadd.s32 %s228, 1
      %p232 = scmp.eq.s32.totalorder %s21, 1
      %p233 = scmp.ne.s32.totalorder %s228, %s230
      %p234 = scmp.eq.s32.totalorder %s21, 0
      %p235 = por %p233, %p234
      %p236 = scmp.ne.s32.totalorder %s228, %s230
      %p237 = scmp.eq.s32.totalorder %s26, 1
      %p238 = por %p236, %p237
      %p239 = scmp.ne.s32.totalorder %s230, %s231
      %p240 = scmp.eq.s32.totalorder %s26, 0
      %p241 = por %p239, %p240
      %p242 = scmp.ne.s32.totalorder %s230, %s231
      %p243 = scmp.eq.s32.totalorder %s27, 1
      %p244 = por %p242, %p243
      %p246 = scmp.ne.s32.totalorder %s231, %s245
      %p247 = scmp.eq.s32.totalorder %s27, 0
      %p248 = por %p246, %p247
      %s250 = sadd.s32 %s249, 1
      %p253 = scmp.eq.s32.totalorder %s21, 1
      %p254 = scmp.ne.s32.totalorder %s249, %s251
      %p255 = scmp.eq.s32.totalorder %s21, 0
      %p256 = por %p254, %p255
      %p257 = scmp.ne.s32.totalorder %s249, %s251
      %p258 = scmp.eq.s32.totalorder %s26, 1
      %p259 = por %p257, %p258
      %p260 = scmp.ne.s32.totalorder %s251, %s252
      %p261 = scmp.eq.s32.totalorder %s26, 0
      %p262 = por %p260, %p261
      %p263 = scmp.ne.s32.totalorder %s251, %s252
      %p264 = scmp.eq.s32.totalorder %s27, 1
      %p265 = por %p263, %p264
      %p267 = scmp.ne.s32.totalorder %s252, %s266
      %p268 = scmp.eq.s32.totalorder %s27, 0
      %p269 = por %p267, %p268
      %s271 = sadd.s32 %s270, 1
      %p274 = scmp.eq.s32.totalorder %s21, 1
      %p275 = scmp.ne.s32.totalorder %s270, %s272
      %p276 = scmp.eq.s32.totalorder %s21, 0
      %p277 = por %p275, %p276
      %p278 = scmp.ne.s32.totalorder %s270, %s272
      %p279 = scmp.eq.s32.totalorder %s26, 1
      %p280 = por %p278, %p279
      %p281 = scmp.ne.s32.totalorder %s272, %s273
      %p282 = scmp.eq.s32.totalorder %s26, 0
      %p283 = por %p281, %p282
      %p284 = scmp.ne.s32.totalorder %s272, %s273
      %p285 = scmp.eq.s32.totalorder %s27, 1
      %p286 = por %p284, %p285
      %p288 = scmp.ne.s32.totalorder %s273, %s287
      %p289 = scmp.eq.s32.totalorder %s27, 0
      %p290 = por %p288, %p289
      %p291 = scmp.le.s32.totalorder 1, %s21
      %p292 = scmp.lt.s32.totalorder %s21, 3
      %p293 = pnand %p291, %p292
      %p294 = pneg %p293
      // Predicated region
      $region9: #{tpu_custom_call.1} parent=5 // pred_check
        _
      $region10: #{tpu_custom_call.1} parent=5 // pred_check_branch
        %296 = sbr.rel (%p293) target = $region12
      $region11: #{tpu_custom_call.1} parent=5 // pred_region
        %s297 = ssub.s32 %s21, 1
        // Predicated region
        $region13: #{tpu_custom_call.1} parent=11 // pred_check
          %p298 = pneg %p94
        $region14: #{tpu_custom_call.1} parent=11 // pred_check_branch
          %300 = sbr.rel (%p298) target = $region16
        $region15: #{tpu_custom_call.1} parent=11 // pred_region
          _
        $region16: #{tpu_custom_call.1} parent=11 // pred_fallthru
          _
        // Predicated region
        $region17: #{tpu_custom_call.1} parent=11 // pred_check
          %p301 = pneg %p115
        $region18: #{tpu_custom_call.1} parent=11 // pred_check_branch
          %303 = sbr.rel (%p301) target = $region20
        $region19: #{tpu_custom_call.1} parent=11 // pred_region
          _
        $region20: #{tpu_custom_call.1} parent=11 // pred_fallthru
          _
        // Predicated region
        $region21: #{tpu_custom_call.1} parent=11 // pred_check
          %p304 = pneg %p136
        $region22: #{tpu_custom_call.1} parent=11 // pred_check_branch
          %306 = sbr.rel (%p304) target = $region24
        $region23: #{tpu_custom_call.1} parent=11 // pred_region
          _
        $region24: #{tpu_custom_call.1} parent=11 // pred_fallthru
          _
        // Predicated region
        $region25: #{tpu_custom_call.1} parent=11 // pred_check
          %p307 = pneg %p157
        $region26: #{tpu_custom_call.1} parent=11 // pred_check_branch
          %309 = sbr.rel (%p307) target = $region28
        $region27: #{tpu_custom_call.1} parent=11 // pred_region
          _
        $region28: #{tpu_custom_call.1} parent=11 // pred_fallthru
          _
        // Predicated region
        $region29: #{tpu_custom_call.1} parent=11 // pred_check
          %p310 = pneg %p178
        $region30: #{tpu_custom_call.1} parent=11 // pred_check_branch
          %312 = sbr.rel (%p310) target = $region32
        $region31: #{tpu_custom_call.1} parent=11 // pred_region
          _
        $region32: #{tpu_custom_call.1} parent=11 // pred_fallthru
          _
        // Predicated region
        $region33: #{tpu_custom_call.1} parent=11 // pred_check
          %p313 = pneg %p199
        $region34: #{tpu_custom_call.1} parent=11 // pred_check_branch
          %315 = sbr.rel (%p313) target = $region36
        $region35: #{tpu_custom_call.1} parent=11 // pred_region
          _
        $region36: #{tpu_custom_call.1} parent=11 // pred_fallthru
          _
      $region12: #{tpu_custom_call.1} parent=5 // pred_fallthru
        _
      %p316 = scmp.lt.s32.totalorder %s21, 2
      // Predicated region
      $region37: #{tpu_custom_call.1} parent=5 // pred_check
        %p317 = pneg %p316
      $region38: #{tpu_custom_call.1} parent=5 // pred_check_branch
        %319 = sbr.rel (%p317) target = $region40
      $region39: #{tpu_custom_call.1} parent=5 // pred_region
        // Predicated region
        $region41: #{tpu_custom_call.1} parent=39 // pred_check
          %p320 = pneg %p41
        $region42: #{tpu_custom_call.1} parent=39 // pred_check_branch
          %322 = sbr.rel (%p320) target = $region44
        $region43: #{tpu_custom_call.1} parent=39 // pred_region
          %s323 = sand.u32 %s31, 1
          %s324 = sand.u32 %s31, 1
          %s325 = smul.addr %s324, 64
          %s326 = scalar_lea.vmem [#allocation4], %s325
          %s327 = smul.u32 4, %s21
          %s328 = smul.addr %s327, 4
          %s329 = scalar_lea.vmem %s0, %s328
          // Predicated region
          $region45: #{tpu_custom_call.1} parent=43 // pred_check
            _
          $region46: #{tpu_custom_call.1} parent=43 // pred_check_branch
            %331 = sbr.rel (0) target = $region48
          $region47: #{tpu_custom_call.1} parent=43 // pred_region
            // Predicated region
            $region49: #{tpu_custom_call.1} parent=47 // pred_check
              _
            $region50: #{tpu_custom_call.1} parent=47 // pred_check_branch
              %333 = sbr.rel target = $region52
            $region51: #{tpu_custom_call.1} parent=47 // pred_region
              // Predicated region
              $region64: #{tpu_custom_call.1} parent=51 // pred_check
                _
              $region65: #{tpu_custom_call.1} parent=51 // pred_check_branch
                %379 = sbr.rel (0) target = $region67
              $region66: #{tpu_custom_call.1} parent=51 // pred_region
                loop: start=0, step=1, limit=1
                $region68: #{tpu_custom_call.1} parent=66 // loop_pre_header
                  _
                $region69: #{tpu_custom_call.1} parent=66 // loop_header
                  %s381 = sphi 0, %s385
                  %p382 = scmp.ge.s32.totalorder %s381, 1
                  %s386 = sphi %s329, %s329
                  %s387 = sphi %s326, %s326
                $region70: #{tpu_custom_call.1} parent=66 // loop_header_branch
                  %384 = sbr.rel (%p382) target = $region74
                $region71: #{tpu_custom_call.1} parent=66 // loop_body
                  _
                $region72: #{tpu_custom_call.1} parent=66 // loop_footer
                  %s385 = sadd.s32 1, %s381
                $region73: #{tpu_custom_call.1} parent=66 // loop_footer_branch
                  %380 = sbr.rel target = $region69
                $region74: #{tpu_custom_call.1} parent=66 // loop_exit
                  _
                %s389 = ssub.s32 16, 1
                loop: start=0, step=1, limit=1
                $region75: #{tpu_custom_call.1} parent=66 // loop_pre_header
                  _
                $region76: #{tpu_custom_call.1} parent=66 // loop_header
                  %s391 = sphi 0, %s395
                  %p392 = scmp.ge.s32.totalorder %s391, 1
                  %s396 = sphi %s329, %s329
                  %s397 = sphi %s326, %s326
                $region77: #{tpu_custom_call.1} parent=66 // loop_header_branch
                  %394 = sbr.rel (%p392) target = $region81
                $region78: #{tpu_custom_call.1} parent=66 // loop_body
                  %v398 = vld [vmem:[%s396] sm:%s389]
                  %399 = vst [vmem:[%s397] sm:%s389] %v398
                  %v400 = vld [vmem:[%s396 + $0x4] sm:%s389]
                  %401 = vst [vmem:[%s397 + $0x4] sm:%s389] %v400
                  %v402 = vld [vmem:[%s396 + $0x8] sm:%s389]
                  %403 = vst [vmem:[%s397 + $0x8] sm:%s389] %v402
                  %v404 = vld [vmem:[%s396 + $0xc] sm:%s389]
                  %405 = vst [vmem:[%s397 + $0xc] sm:%s389] %v404
                  %v406 = vld [vmem:[%s396 + $0x20] sm:%s389]
                  %407 = vst [vmem:[%s397 + $0x10] sm:%s389] %v406
                  %v408 = vld [vmem:[%s396 + $0x24] sm:%s389]
                  %409 = vst [vmem:[%s397 + $0x14] sm:%s389] %v408
                  %v410 = vld [vmem:[%s396 + $0x28] sm:%s389]
                  %411 = vst [vmem:[%s397 + $0x18] sm:%s389] %v410
                  %v412 = vld [vmem:[%s396 + $0x2c] sm:%s389]
                  %413 = vst [vmem:[%s397 + $0x1c] sm:%s389] %v412
                  %v414 = vld [vmem:[%s396 + $0x40] sm:%s389]
                  %415 = vst [vmem:[%s397 + $0x20] sm:%s389] %v414
                  %v416 = vld [vmem:[%s396 + $0x44] sm:%s389]
                  %417 = vst [vmem:[%s397 + $0x24] sm:%s389] %v416
                  %v418 = vld [vmem:[%s396 + $0x48] sm:%s389]
                  %419 = vst [vmem:[%s397 + $0x28] sm:%s389] %v418
                  %v420 = vld [vmem:[%s396 + $0x4c] sm:%s389]
                  %421 = vst [vmem:[%s397 + $0x2c] sm:%s389] %v420
                  %v422 = vld [vmem:[%s396 + $0x60] sm:%s389]
                  %423 = vst [vmem:[%s397 + $0x30] sm:%s389] %v422
                  %v424 = vld [vmem:[%s396 + $0x64] sm:%s389]
                  %425 = vst [vmem:[%s397 + $0x34] sm:%s389] %v424
                  %v426 = vld [vmem:[%s396 + $0x68] sm:%s389]
                  %427 = vst [vmem:[%s397 + $0x38] sm:%s389] %v426
                  %v428 = vld [vmem:[%s396 + $0x6c] sm:%s389]
                  %429 = vst [vmem:[%s397 + $0x3c] sm:%s389] %v428
                $region79: #{tpu_custom_call.1} parent=66 // loop_footer
                  %s395 = sadd.s32 1, %s391
                $region80: #{tpu_custom_call.1} parent=66 // loop_footer_branch
                  %390 = sbr.rel target = $region76
                $region81: #{tpu_custom_call.1} parent=66 // loop_exit
                  _
              $region67: #{tpu_custom_call.1} parent=51 // pred_fallthru
                _
            $region52: #{tpu_custom_call.1} parent=47 // pred_fallthru
              _
            // Predicated region
            $region53: #{tpu_custom_call.1} parent=47 // pred_check
              _
            $region54: #{tpu_custom_call.1} parent=47 // pred_check_branch
              %335 = sbr.rel (0) target = $region56
            $region55: #{tpu_custom_call.1} parent=47 // pred_region
              %s337 = ssub.s32 16, 1
              loop: start=0, step=1, limit=1
              $region57: #{tpu_custom_call.1} parent=55 // loop_pre_header
                _
              $region58: #{tpu_custom_call.1} parent=55 // loop_header
                %s339 = sphi 0, %s343
                %p340 = scmp.ge.s32.totalorder %s339, 1
                %s344 = sphi %s329, %s329
                %s345 = sphi %s326, %s326
              $region59: #{tpu_custom_call.1} parent=55 // loop_header_branch
                %342 = sbr.rel (%p340) target = $region63
              $region60: #{tpu_custom_call.1} parent=55 // loop_body
                %v346 = vld [vmem:[%s344] sm:%s337]
                %347 = vst [vmem:[%s345] sm:%s337] %v346
                %v348 = vld [vmem:[%s344 + $0x4] sm:%s337]
                %349 = vst [vmem:[%s345 + $0x4] sm:%s337] %v348
                %v350 = vld [vmem:[%s344 + $0x8] sm:%s337]
                %351 = vst [vmem:[%s345 + $0x8] sm:%s337] %v350
                %v352 = vld [vmem:[%s344 + $0xc] sm:%s337]
                %353 = vst [vmem:[%s345 + $0xc] sm:%s337] %v352
                %v354 = vld [vmem:[%s344 + $0x20] sm:%s337]
                %355 = vst [vmem:[%s345 + $0x10] sm:%s337] %v354
                %v356 = vld [vmem:[%s344 + $0x24] sm:%s337]
                %357 = vst [vmem:[%s345 + $0x14] sm:%s337] %v356
                %v358 = vld [vmem:[%s344 + $0x28] sm:%s337]
                %359 = vst [vmem:[%s345 + $0x18] sm:%s337] %v358
                %v360 = vld [vmem:[%s344 + $0x2c] sm:%s337]
                %361 = vst [vmem:[%s345 + $0x1c] sm:%s337] %v360
                %v362 = vld [vmem:[%s344 + $0x40] sm:%s337]
                %363 = vst [vmem:[%s345 + $0x20] sm:%s337] %v362
                %v364 = vld [vmem:[%s344 + $0x44] sm:%s337]
                %365 = vst [vmem:[%s345 + $0x24] sm:%s337] %v364
                %v366 = vld [vmem:[%s344 + $0x48] sm:%s337]
                %367 = vst [vmem:[%s345 + $0x28] sm:%s337] %v366
                %v368 = vld [vmem:[%s344 + $0x4c] sm:%s337]
                %369 = vst [vmem:[%s345 + $0x2c] sm:%s337] %v368
                %v370 = vld [vmem:[%s344 + $0x60] sm:%s337]
                %371 = vst [vmem:[%s345 + $0x30] sm:%s337] %v370
                %v372 = vld [vmem:[%s344 + $0x64] sm:%s337]
                %373 = vst [vmem:[%s345 + $0x34] sm:%s337] %v372
                %v374 = vld [vmem:[%s344 + $0x68] sm:%s337]
                %375 = vst [vmem:[%s345 + $0x38] sm:%s337] %v374
                %v376 = vld [vmem:[%s344 + $0x6c] sm:%s337]
                %377 = vst [vmem:[%s345 + $0x3c] sm:%s337] %v376
              $region61: #{tpu_custom_call.1} parent=55 // loop_footer
                %s343 = sadd.s32 1, %s339
              $region62: #{tpu_custom_call.1} parent=55 // loop_footer_branch
                %338 = sbr.rel target = $region58
              $region63: #{tpu_custom_call.1} parent=55 // loop_exit
                _
            $region56: #{tpu_custom_call.1} parent=47 // pred_fallthru
              _
          $region48: #{tpu_custom_call.1} parent=43 // pred_fallthru
            _
          %430 = vnop
        $region44: #{tpu_custom_call.1} parent=39 // pred_fallthru
          _
        // Predicated region
        $region82: #{tpu_custom_call.1} parent=39 // pred_check
          %p431 = pneg %p67
        $region83: #{tpu_custom_call.1} parent=39 // pred_check_branch
          %433 = sbr.rel (%p431) target = $region85
        $region84: #{tpu_custom_call.1} parent=39 // pred_region
          %s434 = sand.u32 %s57, 1
          %s435 = sand.u32 %s57, 1
          %s436 = smul.addr %s435, 64
          %s437 = scalar_lea.vmem [#allocation5], %s436
          %s438 = smul.u32 4, %s21
          %s439 = smul.addr %s438, 4
          %s440 = scalar_lea.vmem %s1, %s439
          // Predicated region
          $region86: #{tpu_custom_call.1} parent=84 // pred_check
            _
          $region87: #{tpu_custom_call.1} parent=84 // pred_check_branch
            %442 = sbr.rel (0) target = $region89
          $region88: #{tpu_custom_call.1} parent=84 // pred_region
            // Predicated region
            $region90: #{tpu_custom_call.1} parent=88 // pred_check
              _
            $region91: #{tpu_custom_call.1} parent=88 // pred_check_branch
              %444 = sbr.rel target = $region93
            $region92: #{tpu_custom_call.1} parent=88 // pred_region
              // Predicated region
              $region105: #{tpu_custom_call.1} parent=92 // pred_check
                _
              $region106: #{tpu_custom_call.1} parent=92 // pred_check_branch
                %490 = sbr.rel (0) target = $region108
              $region107: #{tpu_custom_call.1} parent=92 // pred_region
                loop: start=0, step=1, limit=1
                $region109: #{tpu_custom_call.1} parent=107 // loop_pre_header
                  _
                $region110: #{tpu_custom_call.1} parent=107 // loop_header
                  %s492 = sphi 0, %s496
                  %p493 = scmp.ge.s32.totalorder %s492, 1
                  %s497 = sphi %s440, %s440
                  %s498 = sphi %s437, %s437
                $region111: #{tpu_custom_call.1} parent=107 // loop_header_branch
                  %495 = sbr.rel (%p493) target = $region115
                $region112: #{tpu_custom_call.1} parent=107 // loop_body
                  _
                $region113: #{tpu_custom_call.1} parent=107 // loop_footer
                  %s496 = sadd.s32 1, %s492
                $region114: #{tpu_custom_call.1} parent=107 // loop_footer_branch
                  %491 = sbr.rel target = $region110
                $region115: #{tpu_custom_call.1} parent=107 // loop_exit
                  _
                %s500 = ssub.s32 16, 1
                loop: start=0, step=1, limit=1
                $region116: #{tpu_custom_call.1} parent=107 // loop_pre_header
                  _
                $region117: #{tpu_custom_call.1} parent=107 // loop_header
                  %s502 = sphi 0, %s506
                  %p503 = scmp.ge.s32.totalorder %s502, 1
                  %s507 = sphi %s440, %s440
                  %s508 = sphi %s437, %s437
                $region118: #{tpu_custom_call.1} parent=107 // loop_header_branch
                  %505 = sbr.rel (%p503) target = $region122
                $region119: #{tpu_custom_call.1} parent=107 // loop_body
                  %v509 = vld [vmem:[%s507] sm:%s500]
                  %510 = vst [vmem:[%s508] sm:%s500] %v509
                  %v511 = vld [vmem:[%s507 + $0x4] sm:%s500]
                  %512 = vst [vmem:[%s508 + $0x4] sm:%s500] %v511
                  %v513 = vld [vmem:[%s507 + $0x8] sm:%s500]
                  %514 = vst [vmem:[%s508 + $0x8] sm:%s500] %v513
                  %v515 = vld [vmem:[%s507 + $0xc] sm:%s500]
                  %516 = vst [vmem:[%s508 + $0xc] sm:%s500] %v515
                  %v517 = vld [vmem:[%s507 + $0x20] sm:%s500]
                  %518 = vst [vmem:[%s508 + $0x10] sm:%s500] %v517
                  %v519 = vld [vmem:[%s507 + $0x24] sm:%s500]
                  %520 = vst [vmem:[%s508 + $0x14] sm:%s500] %v519
                  %v521 = vld [vmem:[%s507 + $0x28] sm:%s500]
                  %522 = vst [vmem:[%s508 + $0x18] sm:%s500] %v521
                  %v523 = vld [vmem:[%s507 + $0x2c] sm:%s500]
                  %524 = vst [vmem:[%s508 + $0x1c] sm:%s500] %v523
                  %v525 = vld [vmem:[%s507 + $0x40] sm:%s500]
                  %526 = vst [vmem:[%s508 + $0x20] sm:%s500] %v525
                  %v527 = vld [vmem:[%s507 + $0x44] sm:%s500]
                  %528 = vst [vmem:[%s508 + $0x24] sm:%s500] %v527
                  %v529 = vld [vmem:[%s507 + $0x48] sm:%s500]
                  %530 = vst [vmem:[%s508 + $0x28] sm:%s500] %v529
                  %v531 = vld [vmem:[%s507 + $0x4c] sm:%s500]
                  %532 = vst [vmem:[%s508 + $0x2c] sm:%s500] %v531
                  %v533 = vld [vmem:[%s507 + $0x60] sm:%s500]
                  %534 = vst [vmem:[%s508 + $0x30] sm:%s500] %v533
                  %v535 = vld [vmem:[%s507 + $0x64] sm:%s500]
                  %536 = vst [vmem:[%s508 + $0x34] sm:%s500] %v535
                  %v537 = vld [vmem:[%s507 + $0x68] sm:%s500]
                  %538 = vst [vmem:[%s508 + $0x38] sm:%s500] %v537
                  %v539 = vld [vmem:[%s507 + $0x6c] sm:%s500]
                  %540 = vst [vmem:[%s508 + $0x3c] sm:%s500] %v539
                $region120: #{tpu_custom_call.1} parent=107 // loop_footer
                  %s506 = sadd.s32 1, %s502
                $region121: #{tpu_custom_call.1} parent=107 // loop_footer_branch
                  %501 = sbr.rel target = $region117
                $region122: #{tpu_custom_call.1} parent=107 // loop_exit
                  _
              $region108: #{tpu_custom_call.1} parent=92 // pred_fallthru
                _
            $region93: #{tpu_custom_call.1} parent=88 // pred_fallthru
              _
            // Predicated region
            $region94: #{tpu_custom_call.1} parent=88 // pred_check
              _
            $region95: #{tpu_custom_call.1} parent=88 // pred_check_branch
              %446 = sbr.rel (0) target = $region97
            $region96: #{tpu_custom_call.1} parent=88 // pred_region
              %s448 = ssub.s32 16, 1
              loop: start=0, step=1, limit=1
              $region98: #{tpu_custom_call.1} parent=96 // loop_pre_header
                _
              $region99: #{tpu_custom_call.1} parent=96 // loop_header
                %s450 = sphi 0, %s454
                %p451 = scmp.ge.s32.totalorder %s450, 1
                %s455 = sphi %s440, %s440
                %s456 = sphi %s437, %s437
              $region100: #{tpu_custom_call.1} parent=96 // loop_header_branch
                %453 = sbr.rel (%p451) target = $region104
              $region101: #{tpu_custom_call.1} parent=96 // loop_body
                %v457 = vld [vmem:[%s455] sm:%s448]
                %458 = vst [vmem:[%s456] sm:%s448] %v457
                %v459 = vld [vmem:[%s455 + $0x4] sm:%s448]
                %460 = vst [vmem:[%s456 + $0x4] sm:%s448] %v459
                %v461 = vld [vmem:[%s455 + $0x8] sm:%s448]
                %462 = vst [vmem:[%s456 + $0x8] sm:%s448] %v461
                %v463 = vld [vmem:[%s455 + $0xc] sm:%s448]
                %464 = vst [vmem:[%s456 + $0xc] sm:%s448] %v463
                %v465 = vld [vmem:[%s455 + $0x20] sm:%s448]
                %466 = vst [vmem:[%s456 + $0x10] sm:%s448] %v465
                %v467 = vld [vmem:[%s455 + $0x24] sm:%s448]
                %468 = vst [vmem:[%s456 + $0x14] sm:%s448] %v467
                %v469 = vld [vmem:[%s455 + $0x28] sm:%s448]
                %470 = vst [vmem:[%s456 + $0x18] sm:%s448] %v469
                %v471 = vld [vmem:[%s455 + $0x2c] sm:%s448]
                %472 = vst [vmem:[%s456 + $0x1c] sm:%s448] %v471
                %v473 = vld [vmem:[%s455 + $0x40] sm:%s448]
                %474 = vst [vmem:[%s456 + $0x20] sm:%s448] %v473
                %v475 = vld [vmem:[%s455 + $0x44] sm:%s448]
                %476 = vst [vmem:[%s456 + $0x24] sm:%s448] %v475
                %v477 = vld [vmem:[%s455 + $0x48] sm:%s448]
                %478 = vst [vmem:[%s456 + $0x28] sm:%s448] %v477
                %v479 = vld [vmem:[%s455 + $0x4c] sm:%s448]
                %480 = vst [vmem:[%s456 + $0x2c] sm:%s448] %v479
                %v481 = vld [vmem:[%s455 + $0x60] sm:%s448]
                %482 = vst [vmem:[%s456 + $0x30] sm:%s448] %v481
                %v483 = vld [vmem:[%s455 + $0x64] sm:%s448]
                %484 = vst [vmem:[%s456 + $0x34] sm:%s448] %v483
                %v485 = vld [vmem:[%s455 + $0x68] sm:%s448]
                %486 = vst [vmem:[%s456 + $0x38] sm:%s448] %v485
                %v487 = vld [vmem:[%s455 + $0x6c] sm:%s448]
                %488 = vst [vmem:[%s456 + $0x3c] sm:%s448] %v487
              $region102: #{tpu_custom_call.1} parent=96 // loop_footer
                %s454 = sadd.s32 1, %s450
              $region103: #{tpu_custom_call.1} parent=96 // loop_footer_branch
                %449 = sbr.rel target = $region99
              $region104: #{tpu_custom_call.1} parent=96 // loop_exit
                _
            $region97: #{tpu_custom_call.1} parent=88 // pred_fallthru
              _
          $region89: #{tpu_custom_call.1} parent=84 // pred_fallthru
            _
          %541 = vnop
        $region85: #{tpu_custom_call.1} parent=39 // pred_fallthru
          _
      $region40: #{tpu_custom_call.1} parent=5 // pred_fallthru
        _
      %p542 = scmp.le.s32.totalorder 1, %s21
      %p543 = scmp.lt.s32.totalorder %s21, 3
      %p544 = pnand %p542, %p543
      %p545 = pneg %p544
      // Predicated region
      $region123: #{tpu_custom_call.1} parent=5 // pred_check
        _
      $region124: #{tpu_custom_call.1} parent=5 // pred_check_branch
        %547 = sbr.rel (%p544) target = $region126
      $region125: #{tpu_custom_call.1} parent=5 // pred_region
        %s548 = ssub.s32 %s21, 1
        %s549 = sand.u32 %s34, 1
        %s550 = sand.u32 %s34, 1
        %s551 = smul.addr %s550, 64
        %s552 = scalar_lea.vmem [#allocation4], %s551
        // Predicated region
        $region127: #{tpu_custom_call.1} parent=125 // pred_check
          %p553 = pneg %p47
        $region128: #{tpu_custom_call.1} parent=125 // pred_check_branch
          %555 = sbr.rel (%p553) target = $region130
        $region129: #{tpu_custom_call.1} parent=125 // pred_region
          _
        $region130: #{tpu_custom_call.1} parent=125 // pred_fallthru
          _
        %s556 = sand.u32 %s60, 1
        %s557 = sand.u32 %s60, 1
        %s558 = smul.addr %s557, 64
        %s559 = scalar_lea.vmem [#allocation5], %s558
        // Predicated region
        $region131: #{tpu_custom_call.1} parent=125 // pred_check
          %p560 = pneg %p73
        $region132: #{tpu_custom_call.1} parent=125 // pred_check_branch
          %562 = sbr.rel (%p560) target = $region134
        $region133: #{tpu_custom_call.1} parent=125 // pred_region
          _
        $region134: #{tpu_custom_call.1} parent=125 // pred_fallthru
          _
        %s563 = sand.u32 %s34, 1
        %s564 = sand.u32 %s34, 1
        %s565 = smul.addr %s564, 64
        %s566 = scalar_lea.vmem [#allocation4], %s565
        %p567 = pneg %p47
        %p568 = pneg %p44
        %s569 = sand.u32 %s60, 1
        %s570 = sand.u32 %s60, 1
        %s571 = smul.addr %s570, 64
        %s572 = scalar_lea.vmem [#allocation5], %s571
        %p573 = pneg %p73
        %p574 = pneg %p70
        %p575 = pneg %p94
        %p576 = pneg %p91
        %p577 = pneg %p115
        %p578 = pneg %p112
        %p579 = pneg %p136
        %p580 = pneg %p133
        %p581 = pneg %p157
        %p582 = pneg %p154
        %p583 = pneg %p178
        %p584 = pneg %p175
        %p585 = pneg %p199
        %p586 = pneg %p196
        %p587 = pneg %p220
        %p588 = pneg %p217
        %p589 = pneg %p241
        %p590 = pneg %p238
        %p591 = pneg %p262
        %p592 = pneg %p259
        %p593 = pneg %p283
        %p594 = pneg %p280
        %s595 = smul.u32 4, %s26
        %s596 = smul.u32 4, %s26
        %p597 = scmp.eq.s32.totalorder %s26, 0
        // Predicated region
        $region135: #{tpu_custom_call.1} parent=125 // pred_check
          %p598 = pneg %p597
        $region136: #{tpu_custom_call.1} parent=125 // pred_check_branch
          %600 = sbr.rel (%p598) target = $region138
        $region137: #{tpu_custom_call.1} parent=125 // pred_region
          %vm601 = vcmask 257024
          %602 = vst.msk [vmem:[#allocation2] sm:$0xf] %vm601, 0.0
          %603 = vst.msk [vmem:[#allocation3] sm:$0xf] %vm601, 0.0
        $region138: #{tpu_custom_call.1} parent=125 // pred_fallthru
          _
        %v604 = vld [vmem:[#allocation2] sm:$0xf]
        %v605 = vld [vmem:[%s552] sm:$0xf]
        %v606 = vld [vmem:[%s552 + $0x4] sm:$0xf]
        %v607 = vld [vmem:[%s552 + $0x8] sm:$0xf]
        %v608 = vld [vmem:[%s552 + $0xc] sm:$0xf]
        %v609 = vld [vmem:[%s552 + $0x10] sm:$0xf]
        %v610 = vld [vmem:[%s552 + $0x14] sm:$0xf]
        %v611 = vld [vmem:[%s552 + $0x18] sm:$0xf]
        %v612 = vld [vmem:[%s552 + $0x1c] sm:$0xf]
        %v613 = vld [vmem:[%s552 + $0x20] sm:$0xf]
        %v614 = vld [vmem:[%s552 + $0x24] sm:$0xf]
        %v615 = vld [vmem:[%s552 + $0x28] sm:$0xf]
        %v616 = vld [vmem:[%s552 + $0x2c] sm:$0xf]
        %v617 = vld [vmem:[%s552 + $0x30] sm:$0xf]
        %v618 = vld [vmem:[%s552 + $0x34] sm:$0xf]
        %v619 = vld [vmem:[%s552 + $0x38] sm:$0xf]
        %v620 = vld [vmem:[%s552 + $0x3c] sm:$0xf]
        %v621 = vunpack.c.l.bf16 %v605
        %v622 = vunpack.c.l.bf16 %v606
        %v623 = vunpack.c.l.bf16 %v607
        %v624 = vunpack.c.l.bf16 %v608
        %v625 = vunpack.c.l.bf16 %v609
        %v626 = vunpack.c.l.bf16 %v610
        %v627 = vunpack.c.l.bf16 %v611
        %v628 = vunpack.c.l.bf16 %v612
        %v629 = vunpack.c.l.bf16 %v613
        %v630 = vunpack.c.l.bf16 %v614
        %v631 = vunpack.c.l.bf16 %v615
        %v632 = vunpack.c.l.bf16 %v616
        %v633 = vunpack.c.l.bf16 %v617
        %v634 = vunpack.c.l.bf16 %v618
        %v635 = vunpack.c.l.bf16 %v619
        %v636 = vunpack.c.l.bf16 %v620
        %vm637 = vcmask 261120
        %v638 = vsel %vm637, %v621, 0.0
        %v639 = vsel %vm637, %v622, 0.0
        %v640 = vadd.f32 %v638, %v639
        %v641 = vsel %vm637, %v623, 0.0
        %v642 = vadd.f32 %v640, %v641
        %v643 = vsel %vm637, %v624, 0.0
        %v644 = vadd.f32 %v642, %v643
        %v645 = vrot.slane %v644, 4
        %v646 = vadd.f32 %v644, %v645
        %v647 = vrot.slane %v646, 2
        %v648 = vadd.f32 %v646, %v647
        %v649 = vrot.slane %v648, 1
        %v650 = vadd.f32 %v648, %v649
        %v651 = vsel %vm637, %v625, 0.0
        %v652 = vsel %vm637, %v626, 0.0
        %v653 = vadd.f32 %v651, %v652
        %v654 = vsel %vm637, %v627, 0.0
        %v655 = vadd.f32 %v653, %v654
        %v656 = vsel %vm637, %v628, 0.0
        %v657 = vadd.f32 %v655, %v656
        %v658 = vrot.slane %v657, 4
        %v659 = vadd.f32 %v657, %v658
        %v660 = vrot.slane %v659, 2
        %v661 = vadd.f32 %v659, %v660
        %v662 = vrot.slane %v661, 1
        %v663 = vadd.f32 %v661, %v662
        %v664 = vsel %vm637, %v629, 0.0
        %v665 = vsel %vm637, %v630, 0.0
        %v666 = vadd.f32 %v664, %v665
        %v667 = vsel %vm637, %v631, 0.0
        %v668 = vadd.f32 %v666, %v667
        %v669 = vsel %vm637, %v632, 0.0
        %v670 = vadd.f32 %v668, %v669
        %v671 = vrot.slane %v670, 4
        %v672 = vadd.f32 %v670, %v671
        %v673 = vrot.slane %v672, 2
        %v674 = vadd.f32 %v672, %v673
        %v675 = vrot.slane %v674, 1
        %v676 = vadd.f32 %v674, %v675
        %v677 = vsel %vm637, %v633, 0.0
        %v678 = vsel %vm637, %v634, 0.0
        %v679 = vadd.f32 %v677, %v678
        %v680 = vsel %vm637, %v635, 0.0
        %v681 = vadd.f32 %v679, %v680
        %v682 = vsel %vm637, %v636, 0.0
        %v683 = vadd.f32 %v681, %v682
        %v684 = vrot.slane %v683, 4
        %v685 = vadd.f32 %v683, %v684
        %v686 = vrot.slane %v685, 2
        %v687 = vadd.f32 %v685, %v686
        %v688 = vrot.slane %v687, 1
        %v689 = vadd.f32 %v687, %v688
        %vm694 = vcmask 1041409
        %v695 = vsel %vm694, %v663, %v650
        %vm696 = vcmask 1042434
        %v697 = vsel %vm696, %v676, %v695
        %vm698 = vcmask 1043459
        %v699 = vsel %vm698, %v689, %v697
        %v701 = vadd.f32 %v604, %v699
        %vm702 = vcmask 257024
        %703 = vst.msk [vmem:[#allocation2] sm:$0xf] %vm702, %v701
        %v704 = vld [vmem:[#allocation3] sm:$0xf]
        %v705 = vld [vmem:[%s559] sm:$0xf]
        %v706 = vld [vmem:[%s559 + $0x4] sm:$0xf]
        %v707 = vld [vmem:[%s559 + $0x8] sm:$0xf]
        %v708 = vld [vmem:[%s559 + $0xc] sm:$0xf]
        %v709 = vld [vmem:[%s559 + $0x10] sm:$0xf]
        %v710 = vld [vmem:[%s559 + $0x14] sm:$0xf]
        %v711 = vld [vmem:[%s559 + $0x18] sm:$0xf]
        %v712 = vld [vmem:[%s559 + $0x1c] sm:$0xf]
        %v713 = vld [vmem:[%s559 + $0x20] sm:$0xf]
        %v714 = vld [vmem:[%s559 + $0x24] sm:$0xf]
        %v715 = vld [vmem:[%s559 + $0x28] sm:$0xf]
        %v716 = vld [vmem:[%s559 + $0x2c] sm:$0xf]
        %v717 = vld [vmem:[%s559 + $0x30] sm:$0xf]
        %v718 = vld [vmem:[%s559 + $0x34] sm:$0xf]
        %v719 = vld [vmem:[%s559 + $0x38] sm:$0xf]
        %v720 = vld [vmem:[%s559 + $0x3c] sm:$0xf]
        %v721 = vunpack.c.l.bf16 %v705
        %v722 = vunpack.c.l.bf16 %v706
        %v723 = vunpack.c.l.bf16 %v707
        %v724 = vunpack.c.l.bf16 %v708
        %v725 = vunpack.c.l.bf16 %v709
        %v726 = vunpack.c.l.bf16 %v710
        %v727 = vunpack.c.l.bf16 %v711
        %v728 = vunpack.c.l.bf16 %v712
        %v729 = vunpack.c.l.bf16 %v713
        %v730 = vunpack.c.l.bf16 %v714
        %v731 = vunpack.c.l.bf16 %v715
        %v732 = vunpack.c.l.bf16 %v716
        %v733 = vunpack.c.l.bf16 %v717
        %v734 = vunpack.c.l.bf16 %v718
        %v735 = vunpack.c.l.bf16 %v719
        %v736 = vunpack.c.l.bf16 %v720
        %v737 = vsel %vm637, %v721, 0.0
        %v738 = vsel %vm637, %v722, 0.0
        %v739 = vadd.f32 %v737, %v738
        %v740 = vsel %vm637, %v723, 0.0
        %v741 = vadd.f32 %v739, %v740
        %v742 = vsel %vm637, %v724, 0.0
        %v743 = vadd.f32 %v741, %v742
        %v744 = vrot.slane %v743, 4
        %v745 = vadd.f32 %v743, %v744
        %v746 = vrot.slane %v745, 2
        %v747 = vadd.f32 %v745, %v746
        %v748 = vrot.slane %v747, 1
        %v749 = vadd.f32 %v747, %v748
        %v750 = vsel %vm637, %v725, 0.0
        %v751 = vsel %vm637, %v726, 0.0
        %v752 = vadd.f32 %v750, %v751
        %v753 = vsel %vm637, %v727, 0.0
        %v754 = vadd.f32 %v752, %v753
        %v755 = vsel %vm637, %v728, 0.0
        %v756 = vadd.f32 %v754, %v755
        %v757 = vrot.slane %v756, 4
        %v758 = vadd.f32 %v756, %v757
        %v759 = vrot.slane %v758, 2
        %v760 = vadd.f32 %v758, %v759
        %v761 = vrot.slane %v760, 1
        %v762 = vadd.f32 %v760, %v761
        %v763 = vsel %vm637, %v729, 0.0
        %v764 = vsel %vm637, %v730, 0.0
        %v765 = vadd.f32 %v763, %v764
        %v766 = vsel %vm637, %v731, 0.0
        %v767 = vadd.f32 %v765, %v766
        %v768 = vsel %vm637, %v732, 0.0
        %v769 = vadd.f32 %v767, %v768
        %v770 = vrot.slane %v769, 4
        %v771 = vadd.f32 %v769, %v770
        %v772 = vrot.slane %v771, 2
        %v773 = vadd.f32 %v771, %v772
        %v774 = vrot.slane %v773, 1
        %v775 = vadd.f32 %v773, %v774
        %v776 = vsel %vm637, %v733, 0.0
        %v777 = vsel %vm637, %v734, 0.0
        %v778 = vadd.f32 %v776, %v777
        %v779 = vsel %vm637, %v735, 0.0
        %v780 = vadd.f32 %v778, %v779
        %v781 = vsel %vm637, %v736, 0.0
        %v782 = vadd.f32 %v780, %v781
        %v783 = vrot.slane %v782, 4
        %v784 = vadd.f32 %v782, %v783
        %v785 = vrot.slane %v784, 2
        %v786 = vadd.f32 %v784, %v785
        %v787 = vrot.slane %v786, 1
        %v788 = vadd.f32 %v786, %v787
        %v793 = vsel %vm694, %v762, %v749
        %v794 = vsel %vm696, %v775, %v793
        %v795 = vsel %vm698, %v788, %v794
        %v797 = vadd.f32 %v704, %v795
        %798 = vst.msk [vmem:[#allocation3] sm:$0xf] %vm702, %v797
        %p799 = scmp.eq.s32.totalorder %s26, 1
        // Predicated region
        $region139: #{tpu_custom_call.1} parent=125 // pred_check
          %p800 = pneg %p799
        $region140: #{tpu_custom_call.1} parent=125 // pred_check_branch
          %802 = sbr.rel (%p800) target = $region142
        $region141: #{tpu_custom_call.1} parent=125 // pred_region
          %v803 = vld [vmem:[#allocation2] sm:$0xf]
          %v804 = vmul.f32 %v803, 0.015625
          %v805 = vld [vmem:[#allocation3] sm:$0xf]
          %v806 = vmul.f32 %v805, 0.015625
          %v807 = vld [vmem:[%s2] sm:$0xf]
          %v808 = vld [vmem:[%s2 + $0x4] sm:$0xf]
          %v809 = vld [vmem:[%s2 + $0x8] sm:$0xf]
          %v810 = vld [vmem:[%s2 + $0xc] sm:$0xf]
          %v811 = vunpack.c.l.bf16 %v807
          %v812 = vunpack.c.l.bf16 %v808
          %v813 = vunpack.c.l.bf16 %v809
          %v814 = vunpack.c.l.bf16 %v810
          %v816 = vsel %vm637, %v804, 0
          %818 = vmatpush.msra.mxu0 0.0
          %819 = vmatpush.msra.mxu0 0.0
          %820 = vmatpush.msra.mxu0 0.0
          %821 = vmatpush.msra.mxu0 0.0
          %822 = vmatpush.msra.mxu0 0.0
          %823 = vmatpush.msra.mxu0 0.0
          %824 = vmatpush.msra.mxu0 0.0
          %825 = vmatpush.msra.mxu0 0.0
          %826 = vmatpush.msra.mxu0 0.0
          %827 = vmatpush.msra.mxu0 0.0
          %828 = vmatpush.msra.mxu0 0.0
          %829 = vmatpush.msra.mxu0 0.0
          %830 = vmatpush.msra.mxu0 %v814
          %831 = vmatpush.msra.mxu0 %v813
          %832 = vmatpush.msra.mxu0 %v812
          %833 = vmatpush.msra.mxu0 %v811
          %834 = vmatmul.f32.gmra.mxu0 %v816
          %v835 = vpop.f32.mrf.mxu0
          %v836 = vadd.f32 0.0, %v835
          %837 = vdwg.mxu0
          %v838 = vsel %vm702, %v836, 0.0
          %v839 = vrot.slane %v838, 4
          %v840 = vadd.f32 %v838, %v839
          %v841 = vrot.slane %v840, 2
          %v842 = vadd.f32 %v840, %v841
          %v843 = vrot.slane %v842, 1
          %v844 = vadd.f32 %v842, %v843
          %v845 = vrcp.pop 4.0
          %v846 = vmul.f32 4.0, %v845
          %v847 = vsub.f32 1.0, %v846
          %v848 = vmul.f32 %v845, %v847
          %v849 = vadd.f32 %v845, %v848
          %vm850 = vweird.f32 %v845
          %v851 = vsel %vm850, %v845, %v849
          %v852 = vmul.f32 %v844, %v851
          %v853 = vsub.f32 %v836, %v852
          %v854 = vmul.f32 %v853, %v853
          %v855 = vsel %vm702, %v854, 0.0
          %v856 = vrot.slane %v855, 4
          %v857 = vadd.f32 %v855, %v856
          %v858 = vrot.slane %v857, 2
          %v859 = vadd.f32 %v857, %v858
          %v860 = vrot.slane %v859, 1
          %v861 = vadd.f32 %v859, %v860
          %v862 = vmul.f32 %v861, %v851
          %v863 = vadd.f32 %v862, 1e-05
          %v864 = vrsqrt.pop %v863
          %v865 = vmul.f32 %v864, %v863
          %v866 = vmul.f32 %v865, %v864
          %v867 = vmul.f32 0.5, %v866
          %v868 = vsub.f32 1.5, %v867
          %v869 = vmul.f32 %v864, %v868
          %vm870 = vweird.f32 %v863
          %vm871 = vweird.f32 %v864
          %vm872 = vmor %vm870, %vm871
          %v873 = vsel %vm872, %v864, %v869
          %v874 = vmul.f32 %v853, %v873
          %v875 = vld [vmem:[%s4] sm:$0x1]
          %v877 = vperm.slane %v875, 0
          %v879 = vmul.f32 %v874, %v877
          %v880 = vld [vmem:[%s5] sm:$0x1]
          %v882 = vperm.slane %v880, 0
          %v884 = vadd.f32 %v879, %v882
          %885 = vst.msk [vmem:[#allocation6] sm:$0xf] %vm702, %v884
          %v886 = vld [vmem:[%s3] sm:$0xf]
          %v887 = vld [vmem:[%s3 + $0x4] sm:$0xf]
          %v888 = vld [vmem:[%s3 + $0x8] sm:$0xf]
          %v889 = vld [vmem:[%s3 + $0xc] sm:$0xf]
          %v890 = vunpack.c.l.bf16 %v886
          %v891 = vunpack.c.l.bf16 %v887
          %v892 = vunpack.c.l.bf16 %v888
          %v893 = vunpack.c.l.bf16 %v889
          %v895 = vsel %vm637, %v806, 0
          %897 = vmatpush.msra.mxu0 0.0
          %898 = vmatpush.msra.mxu0 0.0
          %899 = vmatpush.msra.mxu0 0.0
          %900 = vmatpush.msra.mxu0 0.0
          %901 = vmatpush.msra.mxu0 0.0
          %902 = vmatpush.msra.mxu0 0.0
          %903 = vmatpush.msra.mxu0 0.0
          %904 = vmatpush.msra.mxu0 0.0
          %905 = vmatpush.msra.mxu0 0.0
          %906 = vmatpush.msra.mxu0 0.0
          %907 = vmatpush.msra.mxu0 0.0
          %908 = vmatpush.msra.mxu0 0.0
          %909 = vmatpush.msra.mxu0 %v893
          %910 = vmatpush.msra.mxu0 %v892
          %911 = vmatpush.msra.mxu0 %v891
          %912 = vmatpush.msra.mxu0 %v890
          %913 = vmatmul.f32.gmra.mxu0 %v895
          %v914 = vpop.f32.mrf.mxu0
          %v915 = vadd.f32 0.0, %v914
          %916 = vdwg.mxu0
          %v917 = vsel %vm702, %v915, 0.0
          %v918 = vrot.slane %v917, 4
          %v919 = vadd.f32 %v917, %v918
          %v920 = vrot.slane %v919, 2
          %v921 = vadd.f32 %v919, %v920
          %v922 = vrot.slane %v921, 1
          %v923 = vadd.f32 %v921, %v922
          %v924 = vmul.f32 %v923, %v851
          %v925 = vsub.f32 %v915, %v924
          %v926 = vmul.f32 %v925, %v925
          %v927 = vsel %vm702, %v926, 0.0
          %v928 = vrot.slane %v927, 4
          %v929 = vadd.f32 %v927, %v928
          %v930 = vrot.slane %v929, 2
          %v931 = vadd.f32 %v929, %v930
          %v932 = vrot.slane %v931, 1
          %v933 = vadd.f32 %v931, %v932
          %v934 = vmul.f32 %v933, %v851
          %v935 = vadd.f32 %v934, 1e-05
          %v936 = vrsqrt.pop %v935
          %v937 = vmul.f32 %v936, %v935
          %v938 = vmul.f32 %v937, %v936
          %v939 = vmul.f32 0.5, %v938
          %v940 = vsub.f32 1.5, %v939
          %v941 = vmul.f32 %v936, %v940
          %vm942 = vweird.f32 %v935
          %vm943 = vweird.f32 %v936
          %vm944 = vmor %vm942, %vm943
          %v945 = vsel %vm944, %v936, %v941
          %v946 = vmul.f32 %v925, %v945
          %v947 = vld [vmem:[%s6] sm:$0x1]
          %v949 = vperm.slane %v947, 0
          %v951 = vmul.f32 %v946, %v949
          %v952 = vld [vmem:[%s7] sm:$0x1]
          %v954 = vperm.slane %v952, 0
          %v956 = vadd.f32 %v951, %v954
          %957 = vst.msk [vmem:[#allocation8] sm:$0xf] %vm702, %v956
          %958 = vst.msk [vmem:[#allocation10] sm:$0xf] %vm702, %v804
          %959 = vst.msk [vmem:[#allocation11] sm:$0xf] %vm702, %v806
        $region142: #{tpu_custom_call.1} parent=125 // pred_fallthru
          _
        // Predicated region
        $region143: #{tpu_custom_call.1} parent=125 // pred_check
          %p960 = pneg %p217
        $region144: #{tpu_custom_call.1} parent=125 // pred_check_branch
          %962 = sbr.rel (%p960) target = $region146
        $region145: #{tpu_custom_call.1} parent=125 // pred_region
          %964 = vsyncadd [#allocation7], 0
          %s966 = sshll.u32 [#allocation6], 4
          %s967 = int_to_ptr.vmem [resolvable:$true] %s966
          %s968 = sshll.u32 %s8, 4
          %s969 = int_to_ptr.hbm [resolvable:$true] %s968
          %971 = dma.vmem_to_hbm [thread:$0]  %s967, 64, %s969, [#allocation7]
        $region146: #{tpu_custom_call.1} parent=125 // pred_fallthru
          _
        // Predicated region
        $region147: #{tpu_custom_call.1} parent=125 // pred_check
          %p972 = pneg %p238
        $region148: #{tpu_custom_call.1} parent=125 // pred_check_branch
          %974 = sbr.rel (%p972) target = $region150
        $region149: #{tpu_custom_call.1} parent=125 // pred_region
          %976 = vsyncadd [#allocation9], 0
          %s978 = sshll.u32 [#allocation8], 4
          %s979 = int_to_ptr.vmem [resolvable:$true] %s978
          %s980 = sshll.u32 %s9, 4
          %s981 = int_to_ptr.hbm [resolvable:$true] %s980
          %983 = dma.vmem_to_hbm [thread:$0]  %s979, 64, %s981, [#allocation9]
        $region150: #{tpu_custom_call.1} parent=125 // pred_fallthru
          _
        // Predicated region
        $region151: #{tpu_custom_call.1} parent=125 // pred_check
          %p984 = pneg %p259
        $region152: #{tpu_custom_call.1} parent=125 // pred_check_branch
          %986 = sbr.rel (%p984) target = $region154
        $region153: #{tpu_custom_call.1} parent=125 // pred_region
          %988 = vsyncadd [#allocation9], 0
          %s990 = sshll.u32 [#allocation10], 4
          %s991 = int_to_ptr.vmem [resolvable:$true] %s990
          %s992 = sshll.u32 %s10, 4
          %s993 = int_to_ptr.hbm [resolvable:$true] %s992
          %995 = dma.vmem_to_hbm [thread:$0]  %s991, 64, %s993, [#allocation9]
        $region154: #{tpu_custom_call.1} parent=125 // pred_fallthru
          _
        // Predicated region
        $region155: #{tpu_custom_call.1} parent=125 // pred_check
          %p996 = pneg %p280
        $region156: #{tpu_custom_call.1} parent=125 // pred_check_branch
          %998 = sbr.rel (%p996) target = $region158
        $region157: #{tpu_custom_call.1} parent=125 // pred_region
          %1000 = vsyncadd [#allocation12], 0
          %s1002 = sshll.u32 [#allocation11], 4
          %s1003 = int_to_ptr.vmem [resolvable:$true] %s1002
          %s1004 = sshll.u32 %s11, 4
          %s1005 = int_to_ptr.hbm [resolvable:$true] %s1004
          %1007 = dma.vmem_to_hbm [thread:$0]  %s1003, 64, %s1005, [#allocation12]
        $region158: #{tpu_custom_call.1} parent=125 // pred_fallthru
          _
        // Predicated region
        $region159: #{tpu_custom_call.1} parent=125 // pred_check
          %p1008 = pneg %p217
        $region160: #{tpu_custom_call.1} parent=125 // pred_check_branch
          %1010 = sbr.rel (%p1008) target = $region162
        $region161: #{tpu_custom_call.1} parent=125 // pred_region
          %1012 = dma.done [#allocation7], 64
        $region162: #{tpu_custom_call.1} parent=125 // pred_fallthru
          _
        // Predicated region
        $region163: #{tpu_custom_call.1} parent=125 // pred_check
          %p1013 = pneg %p238
        $region164: #{tpu_custom_call.1} parent=125 // pred_check_branch
          %1015 = sbr.rel (%p1013) target = $region166
        $region165: #{tpu_custom_call.1} parent=125 // pred_region
          %1017 = dma.done [#allocation9], 64
        $region166: #{tpu_custom_call.1} parent=125 // pred_fallthru
          _
        // Predicated region
        $region167: #{tpu_custom_call.1} parent=125 // pred_check
          %p1018 = pneg %p259
        $region168: #{tpu_custom_call.1} parent=125 // pred_check_branch
          %1020 = sbr.rel (%p1018) target = $region170
        $region169: #{tpu_custom_call.1} parent=125 // pred_region
          %1022 = dma.done [#allocation9], 64
        $region170: #{tpu_custom_call.1} parent=125 // pred_fallthru
          _
        // Predicated region
        $region171: #{tpu_custom_call.1} parent=125 // pred_check
          %p1023 = pneg %p280
        $region172: #{tpu_custom_call.1} parent=125 // pred_check_branch
          %1025 = sbr.rel (%p1023) target = $region174
        $region173: #{tpu_custom_call.1} parent=125 // pred_region
          %1027 = dma.done [#allocation12], 64
        $region174: #{tpu_custom_call.1} parent=125 // pred_fallthru
          _
      $region126: #{tpu_custom_call.1} parent=5 // pred_fallthru
        _
      %p1028 = scmp.le.s32.totalorder 2, %s21
      // Predicated region
      $region175: #{tpu_custom_call.1} parent=5 // pred_check
        %p1029 = pneg %p1028
      $region176: #{tpu_custom_call.1} parent=5 // pred_check_branch
        %1031 = sbr.rel (%p1029) target = $region178
      $region177: #{tpu_custom_call.1} parent=5 // pred_region
        %s1032 = ssub.s32 %s21, 2
      $region178: #{tpu_custom_call.1} parent=5 // pred_fallthru
        _
    $region6: #{tpu_custom_call.1} parent=1 // loop_footer
      %s25 = sadd.s32 1, %s21
    $region7: #{tpu_custom_call.1} parent=1 // loop_footer_branch
      %20 = sbr.rel target = $region3
    $region8: #{tpu_custom_call.1} parent=1 // loop_exit
      _
    %1033 = vsyncpa [#allocation7], 1
    %s1034 = scalar_lea.sflag [#allocation7], 1
    %1035 = vsyncpa %s1034, 1
    %1036 = vsyncpa [#allocation9], 1
    %1037 = vsyncpa [#allocation12], 1

</llo_original>
